<compile_context>
chip_gen: v5e
topology: v5e:2x2
jax: 0.10.0
libtpu: 0.0.40
codegen_flags: <defaults>
</compile_context>

<pallas_src>
import math

import jax
import jax.numpy as jnp
from jax.experimental import pallas as pl
from jax.experimental.pallas import tpu as pltpu


K = 784  # flattened 28*28 input features (no explicit K padding needed)


def _round_up(x, m):
    return (x + m - 1) // m * m


def _mlp_kernel(x_ref,
                w1_ref, b1_ref,
                w2_ref, b2_ref,
                w3_ref, b3_ref,
                w4_ref, b4_ref,
                o_ref):
    """Fused MLP forward: (Linear+ReLU) x3 -> Linear -> Sigmoid.

    x_ref: (TM, 784) f32 (cast to bf16 in-kernel), w{1,2,3}: bf16 (in, out),
    w4: (1, 128) f32, biases: f32 (1, out).  All matmul accumulation in f32;
    the (TM,512)/(TM,256) intermediates are materialized in bf16.
    """
    x = x_ref[...].astype(jnp.bfloat16)                                   # (TM, 784)

    h = jnp.dot(x, w1_ref[...], preferred_element_type=jnp.float32)
    h = jnp.maximum(h + b1_ref[...], 0.0).astype(jnp.bfloat16)           # ReLU, bf16

    h = jnp.dot(h, w2_ref[...], preferred_element_type=jnp.float32)
    h = jnp.maximum(h + b2_ref[...], 0.0).astype(jnp.bfloat16)

    h = jnp.dot(h, w3_ref[...], preferred_element_type=jnp.float32)
    h = jnp.maximum(h + b3_ref[...], 0.0)                                 # (TM, 128) f32

    # Final 128 -> 1 layer: a 1-wide matmul wastes the MXU; do it on the
    # VPU (multiply) + XLU (lane reduce) instead.
    logit = jnp.sum(h * w4_ref[...], axis=-1, keepdims=True) + b4_ref[...]
    o_ref[...] = jax.nn.sigmoid(logit)                                    # (TM, 1)


def prepare_params(params):
    """One-time conversion of PyTorch-layout params to kernel layout.

    params: dict with w1..w4 of shape (out, in) and b1..b4 of shape (out,).
    Returns kernel-ready arrays: (in, out) bf16 weights, (1, out) f32 biases,
    and the final (1, 128) f32 weight row for the VPU reduce.
    """
    w1 = params["w1"].T.astype(jnp.bfloat16)                  # (784, 512)
    w2 = params["w2"].T.astype(jnp.bfloat16)                  # (512, 256)
    w3 = params["w3"].T.astype(jnp.bfloat16)                  # (256, 128)
    w4 = params["w4"].reshape(1, 128).astype(jnp.float32)     # row for VPU reduce
    b1 = params["b1"].reshape(1, -1).astype(jnp.float32)
    b2 = params["b2"].reshape(1, -1).astype(jnp.float32)
    b3 = params["b3"].reshape(1, -1).astype(jnp.float32)
    b4 = params["b4"].reshape(1, 1).astype(jnp.float32)
    return (w1, b1, w2, b2, w3, b3, w4, b4)


def mnist_model_forward(x_nchw, prepared, *, tile_m=1024):
    """Forward pass matching MNISTModel.forward.

    x_nchw   : (N, 1, 28, 28) float32 (anything flattening to (N, 784)).
    prepared : output of prepare_params().
    returns  : (N, 1) float32 in (0, 1).
    """
    n = x_nchw.shape[0]
    x = x_nchw.reshape(n, -1).astype(jnp.float32)             # nn.Flatten -> (N, 784)
    assert x.shape[1] == K, f"expected {K} features, got {x.shape[1]}"

    # Batch tile: big enough to fill the MXU / amortize per-step pipeline
    # overhead, but not bigger than the (16-row rounded) batch.  Only ragged
    # batches incur a (row-only, f32) pad copy; the common aligned large-batch
    # path streams the caller's buffer directly into the kernel.
    tm = min(tile_m, _round_up(max(n, 1), 16))
    n_pad = _round_up(n, tm)
    if n_pad != n:
        x = jnp.pad(x, ((0, n_pad - n), (0, 0)))

    w1, b1, w2, b2, w3, b3, w4, b4 = prepared
    const = lambda i: (0, 0)   # weights/biases: same (whole) block every grid step

    out = pl.pallas_call(
        _mlp_kernel,
        out_shape=jax.ShapeDtypeStruct((n_pad, 1), jnp.float32),
        grid_spec=pltpu.PrefetchScalarGridSpec(
            num_scalar_prefetch=0,
            grid=(n_pad // tm,),
            in_specs=[
                pl.BlockSpec((tm, K), lambda i: (i, 0)),              # x tile (f32)
                pl.BlockSpec((K, 512), const), pl.BlockSpec((1, 512), const),
                pl.BlockSpec((512, 256), const), pl.BlockSpec((1, 256), const),
                pl.BlockSpec((256, 128), const), pl.BlockSpec((1, 128), const),
                pl.BlockSpec((1, 128), const), pl.BlockSpec((1, 1), const),
            ],
            out_specs=pl.BlockSpec((tm, 1), lambda i: (i, 0)),
        ),
        compiler_params=pltpu.CompilerParams(
            dimension_semantics=("parallel",),   # batch tiles shard across TCs (v7x)
            vmem_limit_bytes=32 << 20,           # ~14 MiB used; safe on v5e..v7x
        ),
    )(x, w1, b1, w2, b2, w3, b3, w4, b4)
    return out[:n]


def init_params(key):
    """Deterministic init matching the module: xavier_uniform_ weights, zero biases."""
    dims = [(512, 784), (256, 512), (128, 256), (1, 128)]   # (out, in), PyTorch layout
    params = {}
    for idx, (fan_out, fan_in) in enumerate(dims, start=1):
        key, sub = jax.random.split(key)
        bound = math.sqrt(6.0 / (fan_in + fan_out))          # xavier uniform, gain=1
        params[f"w{idx}"] = jax.random.uniform(
            sub, (fan_out, fan_in), jnp.float32, minval=-bound, maxval=bound)
        params[f"b{idx}"] = jnp.zeros((fan_out,), jnp.float32)
    return params


def _reference_forward(x_nchw, params):
    """Plain-JAX f32 reference for correctness checking."""
    x = x_nchw.reshape(x_nchw.shape[0], -1).astype(jnp.float32)
    h = jax.nn.relu(x @ params["w1"].T + params["b1"])
    h = jax.nn.relu(h @ params["w2"].T + params["b2"])
    h = jax.nn.relu(h @ params["w3"].T + params["b3"])
    return jax.nn.sigmoid(h @ params["w4"].T + params["b4"])


if __name__ == "__main__":
    key = jax.random.PRNGKey(0)
    key, pkey, xkey, xkey2, xkey3 = jax.random.split(key, 5)

    params = init_params(pkey)
    prepared = prepare_params(params)          # one-time layout/dtype conversion

    # Small MNIST-like batch: (N, C, H, W) = (16, 1, 28, 28)
    x = jax.random.normal(xkey, (16, 1, 28, 28), jnp.float32)
    out = jax.block_until_ready(mnist_model_forward(x, prepared))
    ref = _reference_forward(x, params)
    assert out.shape == (16, 1), out.shape
    err = float(jnp.max(jnp.abs(out - ref)))
    # bf16 MXU operands / bf16 intermediates (f32 accumulation) -> loosened tol.
    assert err < 3e-2, f"mismatch vs reference: max abs err {err}"

    # Ragged batch (not a multiple of 16) exercises the row-padding path.
    x2 = jax.random.normal(xkey2, (5, 1, 28, 28), jnp.float32)
    out2 = jax.block_until_ready(mnist_model_forward(x2, prepared))
    ref2 = _reference_forward(x2, params)
    assert out2.shape == (5, 1), out2.shape
    err2 = float(jnp.max(jnp.abs(out2 - ref2)))
    assert err2 < 3e-2, f"ragged mismatch vs reference: max abs err {err2}"

    # Multi-step grid path (tile_m forced small so the grid has >1 step).
    x3 = jax.random.normal(xkey3, (40, 1, 28, 28), jnp.float32)
    out3 = jax.block_until_ready(mnist_model_forward(x3, prepared, tile_m=16))
    ref3 = _reference_forward(x3, params)
    assert out3.shape == (40, 1), out3.shape
    err3 = float(jnp.max(jnp.abs(out3 - ref3)))
    assert err3 < 3e-2, f"grid mismatch vs reference: max abs err {err3}"

    print("KERNEL_OK")
</pallas_src>

<mosaic_0001>
module attributes {stable_mosaic.version = 11 : i64} {
  func.func @_mlp_kernel(%arg0: i32, %arg1: memref<16x784xf32, #tpu.memory_space<vmem>>, %arg2: memref<784x512xbf16, #tpu.memory_space<vmem>>, %arg3: memref<1x512xf32, #tpu.memory_space<vmem>>, %arg4: memref<512x256xbf16, #tpu.memory_space<vmem>>, %arg5: memref<1x256xf32, #tpu.memory_space<vmem>>, %arg6: memref<256x128xbf16, #tpu.memory_space<vmem>>, %arg7: memref<1x128xf32, #tpu.memory_space<vmem>>, %arg8: memref<1x128xf32, #tpu.memory_space<vmem>>, %arg9: memref<1x1xf32, #tpu.memory_space<vmem>>, %arg10: memref<16x1xf32, #tpu.memory_space<vmem>>) attributes {dimension_semantics = [#tpu.dimension_semantics<parallel>], iteration_bounds = array<i64: 1>, scalar_prefetch = 0 : i64, scratch_operands = 0 : i64, tpu.core_type = #tpu.core_type<tc>, window_params = [{transform_indices = @transform_0, window_bounds = array<i64: 16, 784>}, {pipeline_mode = #tpu.pipeline_mode<synchronous>, transform_indices = @transform_1, window_bounds = array<i64: 784, 512>}, {pipeline_mode = #tpu.pipeline_mode<synchronous>, transform_indices = @transform_2, window_bounds = array<i64: 1, 512>}, {pipeline_mode = #tpu.pipeline_mode<synchronous>, transform_indices = @transform_3, window_bounds = array<i64: 512, 256>}, {pipeline_mode = #tpu.pipeline_mode<synchronous>, transform_indices = @transform_4, window_bounds = array<i64: 1, 256>}, {pipeline_mode = #tpu.pipeline_mode<synchronous>, transform_indices = @transform_5, window_bounds = array<i64: 256, 128>}, {pipeline_mode = #tpu.pipeline_mode<synchronous>, transform_indices = @transform_6, window_bounds = array<i64: 1, 128>}, {pipeline_mode = #tpu.pipeline_mode<synchronous>, transform_indices = @transform_7, window_bounds = array<i64: 1, 128>}, {pipeline_mode = #tpu.pipeline_mode<synchronous>, transform_indices = @transform_8, window_bounds = array<i64: 1, 1>}, {transform_indices = @transform_9, window_bounds = array<i64: 16, 1>}]} {
    %c0 = arith.constant 0 : index
    %c0_0 = arith.constant 0 : index
    %0 = vector.load %arg1[%c0, %c0_0] : memref<16x784xf32, #tpu.memory_space<vmem>>, vector<16x784xf32>
    %1 = arith.truncf %0 : vector<16x784xf32> to vector<16x784xbf16>
    %c0_1 = arith.constant 0 : index
    %c0_2 = arith.constant 0 : index
    %2 = vector.load %arg2[%c0_1, %c0_2] : memref<784x512xbf16, #tpu.memory_space<vmem>>, vector<784x512xbf16>
    %cst = arith.constant dense<0.000000e+00> : vector<16x512xf32>
    %3 = tpu.matmul %1, %2, %cst {dimension_numbers = #tpu.dot_dimension_numbers<[1], [0], [0], [1], [0, 0, 1, 1], [], []>} : vector<16x784xbf16>, vector<784x512xbf16>, vector<16x512xf32> -> vector<16x512xf32>
    %c0_3 = arith.constant 0 : index
    %c0_4 = arith.constant 0 : index
    %4 = vector.load %arg3[%c0_3, %c0_4] : memref<1x512xf32, #tpu.memory_space<vmem>>, vector<1x512xf32>
    %5 = vector.broadcast %4 : vector<1x512xf32> to vector<16x512xf32>
    %6 = arith.addf %3, %5 : vector<16x512xf32>
    %cst_5 = arith.constant 0.000000e+00 : f32
    %7 = vector.broadcast %cst_5 : f32 to vector<16x512xf32>
    %8 = arith.maximumf %6, %7 : vector<16x512xf32>
    %9 = arith.truncf %8 : vector<16x512xf32> to vector<16x512xbf16>
    %c0_6 = arith.constant 0 : index
    %c0_7 = arith.constant 0 : index
    %10 = vector.load %arg4[%c0_6, %c0_7] : memref<512x256xbf16, #tpu.memory_space<vmem>>, vector<512x256xbf16>
    %cst_8 = arith.constant dense<0.000000e+00> : vector<16x256xf32>
    %11 = tpu.matmul %9, %10, %cst_8 {dimension_numbers = #tpu.dot_dimension_numbers<[1], [0], [0], [1], [0, 0, 1, 1], [], []>} : vector<16x512xbf16>, vector<512x256xbf16>, vector<16x256xf32> -> vector<16x256xf32>
    %c0_9 = arith.constant 0 : index
    %c0_10 = arith.constant 0 : index
    %12 = vector.load %arg5[%c0_9, %c0_10] : memref<1x256xf32, #tpu.memory_space<vmem>>, vector<1x256xf32>
    %13 = vector.broadcast %12 : vector<1x256xf32> to vector<16x256xf32>
    %14 = arith.addf %11, %13 : vector<16x256xf32>
    %cst_11 = arith.constant 0.000000e+00 : f32
    %15 = vector.broadcast %cst_11 : f32 to vector<16x256xf32>
    %16 = arith.maximumf %14, %15 : vector<16x256xf32>
    %17 = arith.truncf %16 : vector<16x256xf32> to vector<16x256xbf16>
    %c0_12 = arith.constant 0 : index
    %c0_13 = arith.constant 0 : index
    %18 = vector.load %arg6[%c0_12, %c0_13] : memref<256x128xbf16, #tpu.memory_space<vmem>>, vector<256x128xbf16>
    %cst_14 = arith.constant dense<0.000000e+00> : vector<16x128xf32>
    %19 = tpu.matmul %17, %18, %cst_14 {dimension_numbers = #tpu.dot_dimension_numbers<[1], [0], [0], [1], [0, 0, 1, 1], [], []>} : vector<16x256xbf16>, vector<256x128xbf16>, vector<16x128xf32> -> vector<16x128xf32>
    %c0_15 = arith.constant 0 : index
    %c0_16 = arith.constant 0 : index
    %20 = vector.load %arg7[%c0_15, %c0_16] : memref<1x128xf32, #tpu.memory_space<vmem>>, vector<1x128xf32>
    %21 = vector.broadcast %20 : vector<1x128xf32> to vector<16x128xf32>
    %22 = arith.addf %19, %21 : vector<16x128xf32>
    %cst_17 = arith.constant 0.000000e+00 : f32
    %23 = vector.broadcast %cst_17 : f32 to vector<16x128xf32>
    %24 = arith.maximumf %22, %23 : vector<16x128xf32>
    %c0_18 = arith.constant 0 : index
    %c0_19 = arith.constant 0 : index
    %25 = vector.load %arg8[%c0_18, %c0_19] : memref<1x128xf32, #tpu.memory_space<vmem>>, vector<1x128xf32>
    %26 = vector.broadcast %25 : vector<1x128xf32> to vector<16x128xf32>
    %27 = arith.mulf %24, %26 : vector<16x128xf32>
    %cst_20 = arith.constant dense<0.000000e+00> : vector<16xf32>
    %28 = vector.multi_reduction <add>, %27, %cst_20 [1] : vector<16x128xf32> to vector<16xf32>
    %29 = vector.shape_cast %28 : vector<16xf32> to vector<16x1xf32>
    %c0_21 = arith.constant 0 : index
    %c0_22 = arith.constant 0 : index
    %30 = vector.load %arg9[%c0_21, %c0_22] : memref<1x1xf32, #tpu.memory_space<vmem>>, vector<1x1xf32>
    %31 = vector.broadcast %30 : vector<1x1xf32> to vector<16x1xf32>
    %32 = arith.addf %29, %31 : vector<16x1xf32>
    %33 = arith.negf %32 : vector<16x1xf32>
    %34 = math.exp %33 : vector<16x1xf32>
    %cst_23 = arith.constant 1.000000e+00 : f32
    %35 = vector.broadcast %cst_23 : f32 to vector<16x1xf32>
    %36 = arith.addf %35, %34 : vector<16x1xf32>
    %37 = arith.divf %35, %36 : vector<16x1xf32>
    %c0_24 = arith.constant 0 : index
    %c0_25 = arith.constant 0 : index
    %38 = vector.load %arg10[%c0_24, %c0_25] : memref<16x1xf32, #tpu.memory_space<vmem>>, vector<16x1xf32>
    tpu.vector_store %arg10[%c0_24, %c0_25], %37 {strides = array<i32>} : memref<16x1xf32, #tpu.memory_space<vmem>>, vector<16x1xf32>,
    return
  }
  func.func @transform_0(%arg0: i32) -> (i32, i32) {
    %c0_i32 = arith.constant 0 : i32
    %c0_i32_0 = arith.constant 0 : i32
    return %arg0, %c0_i32 : i32, i32
  }
  func.func @transform_1(%arg0: i32) -> (i32, i32) {
    %c0_i32 = arith.constant 0 : i32
    %c0_i32_0 = arith.constant 0 : i32
    %c0_i32_1 = arith.constant 0 : i32
    return %c0_i32, %c0_i32_0 : i32, i32
  }
  func.func @transform_2(%arg0: i32) -> (i32, i32) {
    %c0_i32 = arith.constant 0 : i32
    %c0_i32_0 = arith.constant 0 : i32
    %c0_i32_1 = arith.constant 0 : i32
    return %c0_i32, %c0_i32_0 : i32, i32
  }
  func.func @transform_3(%arg0: i32) -> (i32, i32) {
    %c0_i32 = arith.constant 0 : i32
    %c0_i32_0 = arith.constant 0 : i32
    %c0_i32_1 = arith.constant 0 : i32
    return %c0_i32, %c0_i32_0 : i32, i32
  }
  func.func @transform_4(%arg0: i32) -> (i32, i32) {
    %c0_i32 = arith.constant 0 : i32
    %c0_i32_0 = arith.constant 0 : i32
    %c0_i32_1 = arith.constant 0 : i32
    return %c0_i32, %c0_i32_0 : i32, i32
  }
  func.func @transform_5(%arg0: i32) -> (i32, i32) {
    %c0_i32 = arith.constant 0 : i32
    %c0_i32_0 = arith.constant 0 : i32
    %c0_i32_1 = arith.constant 0 : i32
    return %c0_i32, %c0_i32_0 : i32, i32
  }
  func.func @transform_6(%arg0: i32) -> (i32, i32) {
    %c0_i32 = arith.constant 0 : i32
    %c0_i32_0 = arith.constant 0 : i32
    %c0_i32_1 = arith.constant 0 : i32
    return %c0_i32, %c0_i32_0 : i32, i32
  }
  func.func @transform_7(%arg0: i32) -> (i32, i32) {
    %c0_i32 = arith.constant 0 : i32
    %c0_i32_0 = arith.constant 0 : i32
    %c0_i32_1 = arith.constant 0 : i32
    return %c0_i32, %c0_i32_0 : i32, i32
  }
  func.func @transform_8(%arg0: i32) -> (i32, i32) {
    %c0_i32 = arith.constant 0 : i32
    %c0_i32_0 = arith.constant 0 : i32
    %c0_i32_1 = arith.constant 0 : i32
    return %c0_i32, %c0_i32_0 : i32, i32
  }
  func.func @transform_9(%arg0: i32) -> (i32, i32) {
    %c0_i32 = arith.constant 0 : i32
    %c0_i32_0 = arith.constant 0 : i32
    return %arg0, %c0_i32 : i32, i32
  }
}

</mosaic_0001>

<llo_original>
// kernel: tpu_custom_call.1
$region0: #{tpu_custom_call.1}
  #allocation0 [shape = 'u32[]', space=smem, size = 0x4, offset = 0x4, fixed_abs, tag = 'smem constant byte address 0x4 - core index']
  #allocation1 [shape = 'u32[72,128]{1,0:T(1,128)}', space=vmem, size = 0x9000, scoped, tag = 'internal scratch']
  #allocation2 [shape = 'f32[1,1]{1,0:T(1,128)S(1)}', space=vmem, size = 0x200, scoped, tag = 'scoped memory for tpu_custom_call.1']
  %s0 = inlined_call_operand.hbm [shape: f32[16,784], index: 0, kind: input, shape index: {}]
  %s1 = inlined_call_operand.hbm [shape: bf16[784,512], index: 1, kind: input, shape index: {}]
  %s2 = inlined_call_operand.hbm [shape: f32[1,512], index: 2, kind: input, shape index: {}]
  %s3 = inlined_call_operand.hbm [shape: bf16[512,256], index: 3, kind: input, shape index: {}]
  %s4 = inlined_call_operand.vmem [shape: f32[1,256], index: 4, kind: input, shape index: {}]
  %s5 = inlined_call_operand.hbm [shape: bf16[256,128], index: 5, kind: input, shape index: {}]
  %s6 = inlined_call_operand.vmem [shape: f32[1,128], index: 6, kind: input, shape index: {}]
  %s7 = inlined_call_operand.vmem [shape: f32[1,128], index: 7, kind: input, shape index: {}]
  %s8 = inlined_call_operand.<no memory space> [shape: f32[1,1], index: 8, kind: input, shape index: {}]
  %s9 = inlined_call_operand.vmem [shape: f32[16,1], index: 9, kind: output, shape index: {}]
  %s10 = sld [smem:[#allocation0]]
  $region66: #{tpu_custom_call.1} parent=0
    _
  %s12 = ssub.s32 1, %s10
  %s13 = scalar_select 0, %s12, %s10
  %v14 = vstv %s8
  %15 = vst [vmem:[#allocation2] sm:$0x1] %v14
  $region1: #{tpu_custom_call.1} parent=0
    #allocation3 [shape = 'u8[57344]{0}', space=vmem, size = 0xe000, scoped, tag = 'input window, operand 0, single buffered']
    #allocation4 [shape = 's32[1]{0}', space=sflag, size = 0x4, scoped, tag = 'scoped memory for tpu_custom_call.1']
    #allocation5 [shape = 'u8[802816]{0}', space=vmem, size = 0xc4000, scoped, tag = 'input window, operand 1, single buffered']
    #allocation6 [shape = 's32[1]{0}', space=sflag, size = 0x4, scoped, tag = 'scoped memory for tpu_custom_call.1']
    #allocation7 [shape = 'u8[2048]{0}', space=vmem, size = 0x800, scoped, tag = 'input window, operand 2, single buffered']
    #allocation8 [shape = 'u8[262144]{0}', space=vmem, size = 0x40000, scoped, tag = 'input window, operand 3, single buffered']
    #allocation9 [shape = 's32[1]{0}', space=sflag, size = 0x4, scoped, tag = 'scoped memory for tpu_custom_call.1']
    #allocation10 [shape = 'u8[65536]{0}', space=vmem, size = 0x10000, scoped, tag = 'input window, operand 5, single buffered']
    %16 = vsyncpa [#allocation4], 0
    %17 = vsyncpa [#allocation6], 0
    %18 = vsyncpa [#allocation9], 0
    // Predicated region
    $region2: #{tpu_custom_call.1} parent=1 // pred_check
      _
    $region3: #{tpu_custom_call.1} parent=1 // pred_check_branch
      %20 = sbr.rel (0) target = $region5
    $region4: #{tpu_custom_call.1} parent=1 // pred_region
      %22 = vsyncadd [#allocation4], 0
      %s23 = sshll.u32 %s0, 4
      %s24 = int_to_ptr.hbm [resolvable:$true] %s23
      %s25 = sshll.u32 [#allocation3], 4
      %s26 = int_to_ptr.vmem [resolvable:$true] %s25
      %31 = dma.hbm_to_vmem [thread:$0]  %s24, 1792, %s26, [#allocation4], 896, 896, 56
    $region5: #{tpu_custom_call.1} parent=1 // pred_fallthru
      _
    // Predicated region
    $region6: #{tpu_custom_call.1} parent=1 // pred_check
      _
    $region7: #{tpu_custom_call.1} parent=1 // pred_check_branch
      %33 = sbr.rel (0) target = $region9
    $region8: #{tpu_custom_call.1} parent=1 // pred_region
      %35 = vsyncadd [#allocation6], 0
      %s36 = sshll.u32 %s1, 4
      %s37 = int_to_ptr.hbm [resolvable:$true] %s36
      %s38 = sshll.u32 [#allocation5], 4
      %s39 = int_to_ptr.vmem [resolvable:$true] %s38
      %44 = dma.hbm_to_vmem [thread:$0]  %s37, 25088, %s39, [#allocation6], 256, 256, 16
    $region9: #{tpu_custom_call.1} parent=1 // pred_fallthru
      _
    // Predicated region
    $region10: #{tpu_custom_call.1} parent=1 // pred_check
      _
    $region11: #{tpu_custom_call.1} parent=1 // pred_check_branch
      %46 = sbr.rel (0) target = $region13
    $region12: #{tpu_custom_call.1} parent=1 // pred_region
      %48 = vsyncadd [#allocation6], 0
      %s50 = sshll.u32 %s2, 4
      %s51 = int_to_ptr.hbm [resolvable:$true] %s50
      %s52 = sshll.u32 [#allocation7], 4
      %s53 = int_to_ptr.vmem [resolvable:$true] %s52
      %55 = dma.hbm_to_vmem [thread:$0]  %s51, 64, %s53, [#allocation6]
    $region13: #{tpu_custom_call.1} parent=1 // pred_fallthru
      _
    // Predicated region
    $region14: #{tpu_custom_call.1} parent=1 // pred_check
      _
    $region15: #{tpu_custom_call.1} parent=1 // pred_check_branch
      %57 = sbr.rel (0) target = $region17
    $region16: #{tpu_custom_call.1} parent=1 // pred_region
      %59 = vsyncadd [#allocation9], 0
      %s60 = sshll.u32 %s3, 4
      %s61 = int_to_ptr.hbm [resolvable:$true] %s60
      %s62 = sshll.u32 [#allocation8], 4
      %s63 = int_to_ptr.vmem [resolvable:$true] %s62
      %68 = dma.hbm_to_vmem [thread:$0]  %s61, 8192, %s63, [#allocation9], 128, 128, 8
    $region17: #{tpu_custom_call.1} parent=1 // pred_fallthru
      _
    // Predicated region
    $region18: #{tpu_custom_call.1} parent=1 // pred_check
      _
    $region19: #{tpu_custom_call.1} parent=1 // pred_check_branch
      %70 = sbr.rel (0) target = $region21
    $region20: #{tpu_custom_call.1} parent=1 // pred_region
      _
    $region21: #{tpu_custom_call.1} parent=1 // pred_fallthru
      _
    // Predicated region
    $region22: #{tpu_custom_call.1} parent=1 // pred_check
      _
    $region23: #{tpu_custom_call.1} parent=1 // pred_check_branch
      %72 = sbr.rel (0) target = $region25
    $region24: #{tpu_custom_call.1} parent=1 // pred_region
      %74 = vsyncadd [#allocation9], 0
      %s75 = sshll.u32 %s5, 4
      %s76 = int_to_ptr.hbm [resolvable:$true] %s75
      %s77 = sshll.u32 [#allocation10], 4
      %s78 = int_to_ptr.vmem [resolvable:$true] %s77
      %83 = dma.hbm_to_vmem [thread:$0]  %s76, 2048, %s78, [#allocation9], 64, 64, 4
    $region25: #{tpu_custom_call.1} parent=1 // pred_fallthru
      _
    // Predicated region
    $region26: #{tpu_custom_call.1} parent=1 // pred_check
      _
    $region27: #{tpu_custom_call.1} parent=1 // pred_check_branch
      %85 = sbr.rel (0) target = $region29
    $region28: #{tpu_custom_call.1} parent=1 // pred_region
      _
    $region29: #{tpu_custom_call.1} parent=1 // pred_fallthru
      _
    // Predicated region
    $region30: #{tpu_custom_call.1} parent=1 // pred_check
      _
    $region31: #{tpu_custom_call.1} parent=1 // pred_check_branch
      %87 = sbr.rel (0) target = $region33
    $region32: #{tpu_custom_call.1} parent=1 // pred_region
      _
    $region33: #{tpu_custom_call.1} parent=1 // pred_fallthru
      _
    // Predicated region
    $region34: #{tpu_custom_call.1} parent=1 // pred_check
      _
    $region35: #{tpu_custom_call.1} parent=1 // pred_check_branch
      %89 = sbr.rel (0) target = $region37
    $region36: #{tpu_custom_call.1} parent=1 // pred_region
      _
    $region37: #{tpu_custom_call.1} parent=1 // pred_fallthru
      _
    // Predicated region
    $region38: #{tpu_custom_call.1} parent=1 // pred_check
      _
    $region39: #{tpu_custom_call.1} parent=1 // pred_check_branch
      %91 = sbr.rel (0) target = $region41
    $region40: #{tpu_custom_call.1} parent=1 // pred_region
      %93 = dma.done [#allocation4], 1792
    $region41: #{tpu_custom_call.1} parent=1 // pred_fallthru
      _
    // Predicated region
    $region42: #{tpu_custom_call.1} parent=1 // pred_check
      _
    $region43: #{tpu_custom_call.1} parent=1 // pred_check_branch
      %95 = sbr.rel (0) target = $region45
    $region44: #{tpu_custom_call.1} parent=1 // pred_region
      %97 = dma.done [#allocation6], 25088
    $region45: #{tpu_custom_call.1} parent=1 // pred_fallthru
      _
    // Predicated region
    $region46: #{tpu_custom_call.1} parent=1 // pred_check
      _
    $region47: #{tpu_custom_call.1} parent=1 // pred_check_branch
      %99 = sbr.rel (0) target = $region49
    $region48: #{tpu_custom_call.1} parent=1 // pred_region
      %101 = dma.done [#allocation6], 64
    $region49: #{tpu_custom_call.1} parent=1 // pred_fallthru
      _
    // Predicated region
    $region50: #{tpu_custom_call.1} parent=1 // pred_check
      _
    $region51: #{tpu_custom_call.1} parent=1 // pred_check_branch
      %103 = sbr.rel (0) target = $region53
    $region52: #{tpu_custom_call.1} parent=1 // pred_region
      %105 = dma.done [#allocation9], 8192
    $region53: #{tpu_custom_call.1} parent=1 // pred_fallthru
      _
    // Predicated region
    $region54: #{tpu_custom_call.1} parent=1 // pred_check
      _
    $region55: #{tpu_custom_call.1} parent=1 // pred_check_branch
      %107 = sbr.rel (0) target = $region57
    $region56: #{tpu_custom_call.1} parent=1 // pred_region
      %109 = dma.done [#allocation9], 2048
    $region57: #{tpu_custom_call.1} parent=1 // pred_fallthru
      _
    %v111 = vld [vmem:[#allocation3] sm:$0xff]
    %v112 = vld [vmem:[#allocation3 + $0x8] sm:$0xff]
    %v113 = vld [vmem:[#allocation3 + $0x10] sm:$0xff]
    %v114 = vld [vmem:[#allocation3 + $0x18] sm:$0xff]
    %v115 = vld [vmem:[#allocation3 + $0x20] sm:$0xff]
    %v116 = vld [vmem:[#allocation3 + $0x28] sm:$0xff]
    %v117 = vld [vmem:[#allocation3 + $0x30] sm:$0xff]
    %v118 = vld [vmem:[#allocation3 + $0x38] sm:$0xff]
    %v119 = vld [vmem:[#allocation3 + $0x40] sm:$0xff]
    %v120 = vld [vmem:[#allocation3 + $0x48] sm:$0xff]
    %v121 = vld [vmem:[#allocation3 + $0x50] sm:$0xff]
    %v122 = vld [vmem:[#allocation3 + $0x58] sm:$0xff]
    %v123 = vld [vmem:[#allocation3 + $0x60] sm:$0xff]
    %v124 = vld [vmem:[#allocation3 + $0x68] sm:$0xff]
    %v125 = vpack.c.bf16 %v118, %v111
    %v126 = vpack.c.bf16 %v119, %v112
    %v127 = vpack.c.bf16 %v120, %v113
    %v128 = vpack.c.bf16 %v121, %v114
    %v129 = vpack.c.bf16 %v122, %v115
    %v130 = vpack.c.bf16 %v123, %v116
    %v131 = vpack.c.bf16 %v124, %v117
    %v132 = vld [vmem:[#allocation5] sm:$0xff]
    %v133 = vld [vmem:[#allocation5 + $0x8] sm:$0xff]
    %v134 = vld [vmem:[#allocation5 + $0x10] sm:$0xff]
    %v135 = vld [vmem:[#allocation5 + $0x18] sm:$0xff]
    %v136 = vld [vmem:[#allocation5 + $0x20] sm:$0xff]
    %v137 = vld [vmem:[#allocation5 + $0x28] sm:$0xff]
    %v138 = vld [vmem:[#allocation5 + $0x30] sm:$0xff]
    %v139 = vld [vmem:[#allocation5 + $0x38] sm:$0xff]
    %v140 = vld [vmem:[#allocation5 + $0x40] sm:$0xff]
    %v141 = vld [vmem:[#allocation5 + $0x48] sm:$0xff]
    %v142 = vld [vmem:[#allocation5 + $0x50] sm:$0xff]
    %v143 = vld [vmem:[#allocation5 + $0x58] sm:$0xff]
    %v144 = vld [vmem:[#allocation5 + $0x60] sm:$0xff]
    %v145 = vld [vmem:[#allocation5 + $0x68] sm:$0xff]
    %v146 = vld [vmem:[#allocation5 + $0x70] sm:$0xff]
    %v147 = vld [vmem:[#allocation5 + $0x78] sm:$0xff]
    %v148 = vld [vmem:[#allocation5 + $0x80] sm:$0xff]
    %v149 = vld [vmem:[#allocation5 + $0x88] sm:$0xff]
    %v150 = vld [vmem:[#allocation5 + $0x90] sm:$0xff]
    %v151 = vld [vmem:[#allocation5 + $0x98] sm:$0xff]
    %v152 = vld [vmem:[#allocation5 + $0xa0] sm:$0xff]
    %v153 = vld [vmem:[#allocation5 + $0xa8] sm:$0xff]
    %v154 = vld [vmem:[#allocation5 + $0xb0] sm:$0xff]
    %v155 = vld [vmem:[#allocation5 + $0xb8] sm:$0xff]
    %v156 = vld [vmem:[#allocation5 + $0xc0] sm:$0xff]
    %v157 = vld [vmem:[#allocation5 + $0xc8] sm:$0xff]
    %v158 = vld [vmem:[#allocation5 + $0xd0] sm:$0xff]
    %v159 = vld [vmem:[#allocation5 + $0xd8] sm:$0xff]
    %v160 = vld [vmem:[#allocation5 + $0xe0] sm:$0xff]
    %v161 = vld [vmem:[#allocation5 + $0xe8] sm:$0xff]
    %v162 = vld [vmem:[#allocation5 + $0xf0] sm:$0xff]
    %v163 = vld [vmem:[#allocation5 + $0xf8] sm:$0xff]
    %v164 = vld [vmem:[#allocation5 + $0x100] sm:$0xff]
    %v165 = vld [vmem:[#allocation5 + $0x108] sm:$0xff]
    %v166 = vld [vmem:[#allocation5 + $0x110] sm:$0xff]
    %v167 = vld [vmem:[#allocation5 + $0x118] sm:$0xff]
    %v168 = vld [vmem:[#allocation5 + $0x120] sm:$0xff]
    %v169 = vld [vmem:[#allocation5 + $0x128] sm:$0xff]
    %v170 = vld [vmem:[#allocation5 + $0x130] sm:$0xff]
    %v171 = vld [vmem:[#allocation5 + $0x138] sm:$0xff]
    %v172 = vld [vmem:[#allocation5 + $0x140] sm:$0xff]
    %v173 = vld [vmem:[#allocation5 + $0x148] sm:$0xff]
    %v174 = vld [vmem:[#allocation5 + $0x150] sm:$0xff]
    %v175 = vld [vmem:[#allocation5 + $0x158] sm:$0xff]
    %v176 = vld [vmem:[#allocation5 + $0x160] sm:$0xff]
    %v177 = vld [vmem:[#allocation5 + $0x168] sm:$0xff]
    %v178 = vld [vmem:[#allocation5 + $0x170] sm:$0xff]
    %v179 = vld [vmem:[#allocation5 + $0x178] sm:$0xff]
    %v180 = vld [vmem:[#allocation5 + $0x180] sm:$0xff]
    %v181 = vld [vmem:[#allocation5 + $0x188] sm:$0xff]
    %v182 = vld [vmem:[#allocation5 + $0x190] sm:$0xff]
    %v183 = vld [vmem:[#allocation5 + $0x198] sm:$0xff]
    %v184 = vld [vmem:[#allocation5 + $0x1a0] sm:$0xff]
    %v185 = vld [vmem:[#allocation5 + $0x1a8] sm:$0xff]
    %v186 = vld [vmem:[#allocation5 + $0x1b0] sm:$0xff]
    %v187 = vld [vmem:[#allocation5 + $0x1b8] sm:$0xff]
    %v188 = vld [vmem:[#allocation5 + $0x1c0] sm:$0xff]
    %v189 = vld [vmem:[#allocation5 + $0x1c8] sm:$0xff]
    %v190 = vld [vmem:[#allocation5 + $0x1d0] sm:$0xff]
    %v191 = vld [vmem:[#allocation5 + $0x1d8] sm:$0xff]
    %v192 = vld [vmem:[#allocation5 + $0x1e0] sm:$0xff]
    %v193 = vld [vmem:[#allocation5 + $0x1e8] sm:$0xff]
    %v194 = vld [vmem:[#allocation5 + $0x1f0] sm:$0xff]
    %v195 = vld [vmem:[#allocation5 + $0x1f8] sm:$0xff]
    %v196 = vld [vmem:[#allocation5 + $0x200] sm:$0xff]
    %v197 = vld [vmem:[#allocation5 + $0x208] sm:$0xff]
    %v198 = vld [vmem:[#allocation5 + $0x210] sm:$0xff]
    %v199 = vld [vmem:[#allocation5 + $0x218] sm:$0xff]
    %v200 = vld [vmem:[#allocation5 + $0x220] sm:$0xff]
    %v201 = vld [vmem:[#allocation5 + $0x228] sm:$0xff]
    %v202 = vld [vmem:[#allocation5 + $0x230] sm:$0xff]
    %v203 = vld [vmem:[#allocation5 + $0x238] sm:$0xff]
    %v204 = vld [vmem:[#allocation5 + $0x240] sm:$0xff]
    %v205 = vld [vmem:[#allocation5 + $0x248] sm:$0xff]
    %v206 = vld [vmem:[#allocation5 + $0x250] sm:$0xff]
    %v207 = vld [vmem:[#allocation5 + $0x258] sm:$0xff]
    %v208 = vld [vmem:[#allocation5 + $0x260] sm:$0xff]
    %v209 = vld [vmem:[#allocation5 + $0x268] sm:$0xff]
    %v210 = vld [vmem:[#allocation5 + $0x270] sm:$0xff]
    %v211 = vld [vmem:[#allocation5 + $0x278] sm:$0xff]
    %v212 = vld [vmem:[#allocation5 + $0x280] sm:$0xff]
    %v213 = vld [vmem:[#allocation5 + $0x288] sm:$0xff]
    %v214 = vld [vmem:[#allocation5 + $0x290] sm:$0xff]
    %v215 = vld [vmem:[#allocation5 + $0x298] sm:$0xff]
    %v216 = vld [vmem:[#allocation5 + $0x2a0] sm:$0xff]
    %v217 = vld [vmem:[#allocation5 + $0x2a8] sm:$0xff]
    %v218 = vld [vmem:[#allocation5 + $0x2b0] sm:$0xff]
    %v219 = vld [vmem:[#allocation5 + $0x2b8] sm:$0xff]
    %v220 = vld [vmem:[#allocation5 + $0x2c0] sm:$0xff]
    %v221 = vld [vmem:[#allocation5 + $0x2c8] sm:$0xff]
    %v222 = vld [vmem:[#allocation5 + $0x2d0] sm:$0xff]
    %v223 = vld [vmem:[#allocation5 + $0x2d8] sm:$0xff]
    %v224 = vld [vmem:[#allocation5 + $0x2e0] sm:$0xff]
    %v225 = vld [vmem:[#allocation5 + $0x2e8] sm:$0xff]
    %v226 = vld [vmem:[#allocation5 + $0x2f0] sm:$0xff]
    %v227 = vld [vmem:[#allocation5 + $0x2f8] sm:$0xff]
    %v228 = vld [vmem:[#allocation5 + $0x300] sm:$0xff]
    %v229 = vld [vmem:[#allocation5 + $0x308] sm:$0xff]
    %v230 = vld [vmem:[#allocation5 + $0x310] sm:$0xff]
    %v231 = vld [vmem:[#allocation5 + $0x318] sm:$0xff]
    %v232 = vld [vmem:[#allocation5 + $0x320] sm:$0xff]
    %v233 = vld [vmem:[#allocation5 + $0x328] sm:$0xff]
    %v234 = vld [vmem:[#allocation5 + $0x330] sm:$0xff]
    %v235 = vld [vmem:[#allocation5 + $0x338] sm:$0xff]
    %v236 = vld [vmem:[#allocation5 + $0x340] sm:$0xff]
    %v237 = vld [vmem:[#allocation5 + $0x348] sm:$0xff]
    %v238 = vld [vmem:[#allocation5 + $0x350] sm:$0xff]
    %v239 = vld [vmem:[#allocation5 + $0x358] sm:$0xff]
    %v240 = vld [vmem:[#allocation5 + $0x360] sm:$0xff]
    %v241 = vld [vmem:[#allocation5 + $0x368] sm:$0xff]
    %v242 = vld [vmem:[#allocation5 + $0x370] sm:$0xff]
    %v243 = vld [vmem:[#allocation5 + $0x378] sm:$0xff]
    %v244 = vld [vmem:[#allocation5 + $0x380] sm:$0xff]
    %v245 = vld [vmem:[#allocation5 + $0x388] sm:$0xff]
    %v246 = vld [vmem:[#allocation5 + $0x390] sm:$0xff]
    %v247 = vld [vmem:[#allocation5 + $0x398] sm:$0xff]
    %v248 = vld [vmem:[#allocation5 + $0x3a0] sm:$0xff]
    %v249 = vld [vmem:[#allocation5 + $0x3a8] sm:$0xff]
    %v250 = vld [vmem:[#allocation5 + $0x3b0] sm:$0xff]
    %v251 = vld [vmem:[#allocation5 + $0x3b8] sm:$0xff]
    %v252 = vld [vmem:[#allocation5 + $0x3c0] sm:$0xff]
    %v253 = vld [vmem:[#allocation5 + $0x3c8] sm:$0xff]
    %v254 = vld [vmem:[#allocation5 + $0x3d0] sm:$0xff]
    %v255 = vld [vmem:[#allocation5 + $0x3d8] sm:$0xff]
    %v256 = vld [vmem:[#allocation5 + $0x3e0] sm:$0xff]
    %v257 = vld [vmem:[#allocation5 + $0x3e8] sm:$0xff]
    %v258 = vld [vmem:[#allocation5 + $0x3f0] sm:$0xff]
    %v259 = vld [vmem:[#allocation5 + $0x3f8] sm:$0xff]
    %v260 = vld [vmem:[#allocation5 + $0x400] sm:$0xff]
    %v261 = vld [vmem:[#allocation5 + $0x408] sm:$0xff]
    %v262 = vld [vmem:[#allocation5 + $0x410] sm:$0xff]
    %v263 = vld [vmem:[#allocation5 + $0x418] sm:$0xff]
    %v264 = vld [vmem:[#allocation5 + $0x420] sm:$0xff]
    %v265 = vld [vmem:[#allocation5 + $0x428] sm:$0xff]
    %v266 = vld [vmem:[#allocation5 + $0x430] sm:$0xff]
    %v267 = vld [vmem:[#allocation5 + $0x438] sm:$0xff]
    %v268 = vld [vmem:[#allocation5 + $0x440] sm:$0xff]
    %v269 = vld [vmem:[#allocation5 + $0x448] sm:$0xff]
    %v270 = vld [vmem:[#allocation5 + $0x450] sm:$0xff]
    %v271 = vld [vmem:[#allocation5 + $0x458] sm:$0xff]
    %v272 = vld [vmem:[#allocation5 + $0x460] sm:$0xff]
    %v273 = vld [vmem:[#allocation5 + $0x468] sm:$0xff]
    %v274 = vld [vmem:[#allocation5 + $0x470] sm:$0xff]
    %v275 = vld [vmem:[#allocation5 + $0x478] sm:$0xff]
    %v276 = vld [vmem:[#allocation5 + $0x480] sm:$0xff]
    %v277 = vld [vmem:[#allocation5 + $0x488] sm:$0xff]
    %v278 = vld [vmem:[#allocation5 + $0x490] sm:$0xff]
    %v279 = vld [vmem:[#allocation5 + $0x498] sm:$0xff]
    %v280 = vld [vmem:[#allocation5 + $0x4a0] sm:$0xff]
    %v281 = vld [vmem:[#allocation5 + $0x4a8] sm:$0xff]
    %v282 = vld [vmem:[#allocation5 + $0x4b0] sm:$0xff]
    %v283 = vld [vmem:[#allocation5 + $0x4b8] sm:$0xff]
    %v284 = vld [vmem:[#allocation5 + $0x4c0] sm:$0xff]
    %v285 = vld [vmem:[#allocation5 + $0x4c8] sm:$0xff]
    %v286 = vld [vmem:[#allocation5 + $0x4d0] sm:$0xff]
    %v287 = vld [vmem:[#allocation5 + $0x4d8] sm:$0xff]
    %v288 = vld [vmem:[#allocation5 + $0x4e0] sm:$0xff]
    %v289 = vld [vmem:[#allocation5 + $0x4e8] sm:$0xff]
    %v290 = vld [vmem:[#allocation5 + $0x4f0] sm:$0xff]
    %v291 = vld [vmem:[#allocation5 + $0x4f8] sm:$0xff]
    %v292 = vld [vmem:[#allocation5 + $0x500] sm:$0xff]
    %v293 = vld [vmem:[#allocation5 + $0x508] sm:$0xff]
    %v294 = vld [vmem:[#allocation5 + $0x510] sm:$0xff]
    %v295 = vld [vmem:[#allocation5 + $0x518] sm:$0xff]
    %v296 = vld [vmem:[#allocation5 + $0x520] sm:$0xff]
    %v297 = vld [vmem:[#allocation5 + $0x528] sm:$0xff]
    %v298 = vld [vmem:[#allocation5 + $0x530] sm:$0xff]
    %v299 = vld [vmem:[#allocation5 + $0x538] sm:$0xff]
    %v300 = vld [vmem:[#allocation5 + $0x540] sm:$0xff]
    %v301 = vld [vmem:[#allocation5 + $0x548] sm:$0xff]
    %v302 = vld [vmem:[#allocation5 + $0x550] sm:$0xff]
    %v303 = vld [vmem:[#allocation5 + $0x558] sm:$0xff]
    %v304 = vld [vmem:[#allocation5 + $0x560] sm:$0xff]
    %v305 = vld [vmem:[#allocation5 + $0x568] sm:$0xff]
    %v306 = vld [vmem:[#allocation5 + $0x570] sm:$0xff]
    %v307 = vld [vmem:[#allocation5 + $0x578] sm:$0xff]
    %v308 = vld [vmem:[#allocation5 + $0x580] sm:$0xff]
    %v309 = vld [vmem:[#allocation5 + $0x588] sm:$0xff]
    %v310 = vld [vmem:[#allocation5 + $0x590] sm:$0xff]
    %v311 = vld [vmem:[#allocation5 + $0x598] sm:$0xff]
    %v312 = vld [vmem:[#allocation5 + $0x5a0] sm:$0xff]
    %v313 = vld [vmem:[#allocation5 + $0x5a8] sm:$0xff]
    %v314 = vld [vmem:[#allocation5 + $0x5b0] sm:$0xff]
    %v315 = vld [vmem:[#allocation5 + $0x5b8] sm:$0xff]
    %v316 = vld [vmem:[#allocation5 + $0x5c0] sm:$0xff]
    %v317 = vld [vmem:[#allocation5 + $0x5c8] sm:$0xff]
    %v318 = vld [vmem:[#allocation5 + $0x5d0] sm:$0xff]
    %v319 = vld [vmem:[#allocation5 + $0x5d8] sm:$0xff]
    %v320 = vld [vmem:[#allocation5 + $0x5e0] sm:$0xff]
    %v321 = vld [vmem:[#allocation5 + $0x5e8] sm:$0xff]
    %v322 = vld [vmem:[#allocation5 + $0x5f0] sm:$0xff]
    %v323 = vld [vmem:[#allocation5 + $0x5f8] sm:$0xff]
    %v324 = vld [vmem:[#allocation5 + $0x600] sm:$0xff]
    %v325 = vld [vmem:[#allocation5 + $0x608] sm:$0xff]
    %v326 = vld [vmem:[#allocation5 + $0x610] sm:$0xff]
    %v327 = vld [vmem:[#allocation5 + $0x618] sm:$0xff]
    %v328 = vld [vmem:[#allocation7] sm:$0xf]
    %v330 = vperm.slane %v328, 0
    %v331 = vperm.slane %v328, 1
    %v332 = vperm.slane %v328, 2
    %v333 = vperm.slane %v328, 3
    %v534 = vunpack.c.l.b16 %v132
    %v535 = vunpack.c.h.b16 %v132
    %v536 = vunpack.c.l.b16 %v133
    %v537 = vunpack.c.h.b16 %v133
    %v538 = vunpack.c.l.b16 %v134
    %v539 = vunpack.c.h.b16 %v134
    %v540 = vunpack.c.l.b16 %v135
    %v541 = vunpack.c.h.b16 %v135
    %v542 = vunpack.c.l.b16 %v136
    %v543 = vunpack.c.h.b16 %v136
    %v544 = vunpack.c.l.b16 %v137
    %v545 = vunpack.c.h.b16 %v137
    %v546 = vunpack.c.l.b16 %v138
    %v547 = vunpack.c.h.b16 %v138
    %v548 = vunpack.c.l.b16 %v139
    %v549 = vunpack.c.h.b16 %v139
    %v550 = vunpack.c.l.b16 %v140
    %v551 = vunpack.c.h.b16 %v140
    %v552 = vunpack.c.l.b16 %v141
    %v553 = vunpack.c.h.b16 %v141
    %v554 = vunpack.c.l.b16 %v142
    %v555 = vunpack.c.h.b16 %v142
    %v556 = vunpack.c.l.b16 %v143
    %v557 = vunpack.c.h.b16 %v143
    %v558 = vunpack.c.l.b16 %v144
    %v559 = vunpack.c.h.b16 %v144
    %v560 = vunpack.c.l.b16 %v145
    %v561 = vunpack.c.h.b16 %v145
    %v562 = vunpack.c.l.b16 %v146
    %v563 = vunpack.c.h.b16 %v146
    %v564 = vunpack.c.l.b16 %v147
    %v565 = vunpack.c.h.b16 %v147
    %v566 = vunpack.c.l.b16 %v148
    %v567 = vunpack.c.h.b16 %v148
    %v568 = vunpack.c.l.b16 %v149
    %v569 = vunpack.c.h.b16 %v149
    %v570 = vunpack.c.l.b16 %v150
    %v571 = vunpack.c.h.b16 %v150
    %v572 = vunpack.c.l.b16 %v151
    %v573 = vunpack.c.h.b16 %v151
    %v574 = vunpack.c.l.b16 %v152
    %v575 = vunpack.c.h.b16 %v152
    %v576 = vunpack.c.l.b16 %v153
    %v577 = vunpack.c.h.b16 %v153
    %v578 = vunpack.c.l.b16 %v154
    %v579 = vunpack.c.h.b16 %v154
    %v580 = vunpack.c.l.b16 %v155
    %v581 = vunpack.c.h.b16 %v155
    %v582 = vunpack.c.l.b16 %v156
    %v583 = vunpack.c.h.b16 %v156
    %v584 = vunpack.c.l.b16 %v157
    %v585 = vunpack.c.h.b16 %v157
    %v586 = vunpack.c.l.b16 %v158
    %v587 = vunpack.c.h.b16 %v158
    %v588 = vunpack.c.l.b16 %v159
    %v589 = vunpack.c.h.b16 %v159
    %v590 = vunpack.c.l.b16 %v160
    %v591 = vunpack.c.h.b16 %v160
    %v592 = vunpack.c.l.b16 %v161
    %v593 = vunpack.c.h.b16 %v161
    %v594 = vunpack.c.l.b16 %v162
    %v595 = vunpack.c.h.b16 %v162
    %v596 = vunpack.c.l.b16 %v163
    %v597 = vunpack.c.h.b16 %v163
    %v598 = vunpack.c.l.b16 %v164
    %v599 = vunpack.c.h.b16 %v164
    %v600 = vunpack.c.l.b16 %v165
    %v601 = vunpack.c.h.b16 %v165
    %v602 = vunpack.c.l.b16 %v166
    %v603 = vunpack.c.h.b16 %v166
    %v604 = vunpack.c.l.b16 %v167
    %v605 = vunpack.c.h.b16 %v167
    %v606 = vunpack.c.l.b16 %v168
    %v607 = vunpack.c.h.b16 %v168
    %v608 = vunpack.c.l.b16 %v169
    %v609 = vunpack.c.h.b16 %v169
    %v610 = vunpack.c.l.b16 %v170
    %v611 = vunpack.c.h.b16 %v170
    %v612 = vunpack.c.l.b16 %v171
    %v613 = vunpack.c.h.b16 %v171
    %v614 = vunpack.c.l.b16 %v172
    %v615 = vunpack.c.h.b16 %v172
    %v616 = vunpack.c.l.b16 %v173
    %v617 = vunpack.c.h.b16 %v173
    %v618 = vunpack.c.l.b16 %v174
    %v619 = vunpack.c.h.b16 %v174
    %v620 = vunpack.c.l.b16 %v175
    %v621 = vunpack.c.h.b16 %v175
    %v622 = vunpack.c.l.b16 %v176
    %v623 = vunpack.c.h.b16 %v176
    %v624 = vunpack.c.l.b16 %v177
    %v625 = vunpack.c.h.b16 %v177
    %v626 = vunpack.c.l.b16 %v178
    %v627 = vunpack.c.h.b16 %v178
    %v628 = vunpack.c.l.b16 %v179
    %v629 = vunpack.c.h.b16 %v179
    %v630 = vunpack.c.l.b16 %v180
    %v631 = vunpack.c.h.b16 %v180
    %v632 = vunpack.c.l.b16 %v181
    %v633 = vunpack.c.h.b16 %v181
    %v634 = vunpack.c.l.b16 %v182
    %v635 = vunpack.c.h.b16 %v182
    %v636 = vunpack.c.l.b16 %v183
    %v637 = vunpack.c.h.b16 %v183
    %v638 = vunpack.c.l.b16 %v184
    %v639 = vunpack.c.h.b16 %v184
    %v640 = vunpack.c.l.b16 %v185
    %v641 = vunpack.c.h.b16 %v185
    %v642 = vunpack.c.l.b16 %v186
    %v643 = vunpack.c.h.b16 %v186
    %v644 = vunpack.c.l.b16 %v187
    %v645 = vunpack.c.h.b16 %v187
    %v646 = vunpack.c.l.b16 %v188
    %v647 = vunpack.c.h.b16 %v188
    %v648 = vunpack.c.l.b16 %v189
    %v649 = vunpack.c.h.b16 %v189
    %v650 = vunpack.c.l.b16 %v190
    %v651 = vunpack.c.h.b16 %v190
    %v652 = vunpack.c.l.b16 %v191
    %v653 = vunpack.c.h.b16 %v191
    %v654 = vunpack.c.l.b16 %v192
    %v655 = vunpack.c.h.b16 %v192
    %v656 = vunpack.c.l.b16 %v193
    %v657 = vunpack.c.h.b16 %v193
    %v658 = vunpack.c.l.b16 %v194
    %v659 = vunpack.c.h.b16 %v194
    %v660 = vunpack.c.l.b16 %v195
    %v661 = vunpack.c.h.b16 %v195
    %v662 = vunpack.c.l.b16 %v196
    %v663 = vunpack.c.h.b16 %v196
    %v664 = vunpack.c.l.b16 %v197
    %v665 = vunpack.c.h.b16 %v197
    %v666 = vunpack.c.l.b16 %v198
    %v667 = vunpack.c.h.b16 %v198
    %v668 = vunpack.c.l.b16 %v199
    %v669 = vunpack.c.h.b16 %v199
    %v670 = vunpack.c.l.b16 %v200
    %v671 = vunpack.c.h.b16 %v200
    %v672 = vunpack.c.l.b16 %v201
    %v673 = vunpack.c.h.b16 %v201
    %v674 = vunpack.c.l.b16 %v202
    %v675 = vunpack.c.h.b16 %v202
    %v676 = vunpack.c.l.b16 %v203
    %v677 = vunpack.c.h.b16 %v203
    %v678 = vunpack.c.l.b16 %v204
    %v679 = vunpack.c.h.b16 %v204
    %v680 = vunpack.c.l.b16 %v205
    %v681 = vunpack.c.h.b16 %v205
    %v682 = vunpack.c.l.b16 %v206
    %v683 = vunpack.c.h.b16 %v206
    %v684 = vunpack.c.l.b16 %v207
    %v685 = vunpack.c.h.b16 %v207
    %v686 = vunpack.c.l.b16 %v208
    %v687 = vunpack.c.h.b16 %v208
    %v688 = vunpack.c.l.b16 %v209
    %v689 = vunpack.c.h.b16 %v209
    %v690 = vunpack.c.l.b16 %v210
    %v691 = vunpack.c.h.b16 %v210
    %v692 = vunpack.c.l.b16 %v211
    %v693 = vunpack.c.h.b16 %v211
    %v694 = vunpack.c.l.b16 %v212
    %v695 = vunpack.c.h.b16 %v212
    %v696 = vunpack.c.l.b16 %v213
    %v697 = vunpack.c.h.b16 %v213
    %v698 = vunpack.c.l.b16 %v214
    %v699 = vunpack.c.h.b16 %v214
    %v700 = vunpack.c.l.b16 %v215
    %v701 = vunpack.c.h.b16 %v215
    %v702 = vunpack.c.l.b16 %v216
    %v703 = vunpack.c.h.b16 %v216
    %v704 = vunpack.c.l.b16 %v217
    %v705 = vunpack.c.h.b16 %v217
    %v706 = vunpack.c.l.b16 %v218
    %v707 = vunpack.c.h.b16 %v218
    %v708 = vunpack.c.l.b16 %v219
    %v709 = vunpack.c.h.b16 %v219
    %v710 = vunpack.c.l.b16 %v220
    %v711 = vunpack.c.h.b16 %v220
    %v712 = vunpack.c.l.b16 %v221
    %v713 = vunpack.c.h.b16 %v221
    %v714 = vunpack.c.l.b16 %v222
    %v715 = vunpack.c.h.b16 %v222
    %v716 = vunpack.c.l.b16 %v223
    %v717 = vunpack.c.h.b16 %v223
    %v718 = vunpack.c.l.b16 %v224
    %v719 = vunpack.c.h.b16 %v224
    %v720 = vunpack.c.l.b16 %v225
    %v721 = vunpack.c.h.b16 %v225
    %v722 = vunpack.c.l.b16 %v226
    %v723 = vunpack.c.h.b16 %v226
    %v724 = vunpack.c.l.b16 %v227
    %v725 = vunpack.c.h.b16 %v227
    %v726 = vunpack.c.l.b16 %v228
    %v727 = vunpack.c.h.b16 %v228
    %v728 = vunpack.c.l.b16 %v229
    %v729 = vunpack.c.h.b16 %v229
    %v730 = vunpack.c.l.b16 %v230
    %v731 = vunpack.c.h.b16 %v230
    %v732 = vunpack.c.l.b16 %v231
    %v733 = vunpack.c.h.b16 %v231
    %v734 = vunpack.c.l.b16 %v232
    %v735 = vunpack.c.h.b16 %v232
    %v736 = vunpack.c.l.b16 %v233
    %v737 = vunpack.c.h.b16 %v233
    %v738 = vunpack.c.l.b16 %v234
    %v739 = vunpack.c.h.b16 %v234
    %v740 = vunpack.c.l.b16 %v235
    %v741 = vunpack.c.h.b16 %v235
    %v742 = vunpack.c.l.b16 %v236
    %v743 = vunpack.c.h.b16 %v236
    %v744 = vunpack.c.l.b16 %v237
    %v745 = vunpack.c.h.b16 %v237
    %v746 = vunpack.c.l.b16 %v238
    %v747 = vunpack.c.h.b16 %v238
    %v748 = vunpack.c.l.b16 %v239
    %v749 = vunpack.c.h.b16 %v239
    %v750 = vunpack.c.l.b16 %v240
    %v751 = vunpack.c.h.b16 %v240
    %v752 = vunpack.c.l.b16 %v241
    %v753 = vunpack.c.h.b16 %v241
    %v754 = vunpack.c.l.b16 %v242
    %v755 = vunpack.c.h.b16 %v242
    %v756 = vunpack.c.l.b16 %v243
    %v757 = vunpack.c.h.b16 %v243
    %v758 = vunpack.c.l.b16 %v244
    %v759 = vunpack.c.h.b16 %v244
    %v760 = vunpack.c.l.b16 %v245
    %v761 = vunpack.c.h.b16 %v245
    %v762 = vunpack.c.l.b16 %v246
    %v763 = vunpack.c.h.b16 %v246
    %v764 = vunpack.c.l.b16 %v247
    %v765 = vunpack.c.h.b16 %v247
    %v766 = vunpack.c.l.b16 %v248
    %v767 = vunpack.c.h.b16 %v248
    %v768 = vunpack.c.l.b16 %v249
    %v769 = vunpack.c.h.b16 %v249
    %v770 = vunpack.c.l.b16 %v250
    %v771 = vunpack.c.h.b16 %v250
    %v772 = vunpack.c.l.b16 %v251
    %v773 = vunpack.c.h.b16 %v251
    %v774 = vunpack.c.l.b16 %v252
    %v775 = vunpack.c.h.b16 %v252
    %v776 = vunpack.c.l.b16 %v253
    %v777 = vunpack.c.h.b16 %v253
    %v778 = vunpack.c.l.b16 %v254
    %v779 = vunpack.c.h.b16 %v254
    %v780 = vunpack.c.l.b16 %v255
    %v781 = vunpack.c.h.b16 %v255
    %v782 = vunpack.c.l.b16 %v256
    %v783 = vunpack.c.h.b16 %v256
    %v784 = vunpack.c.l.b16 %v257
    %v785 = vunpack.c.h.b16 %v257
    %v786 = vunpack.c.l.b16 %v258
    %v787 = vunpack.c.h.b16 %v258
    %v788 = vunpack.c.l.b16 %v259
    %v789 = vunpack.c.h.b16 %v259
    %v790 = vunpack.c.l.b16 %v260
    %v791 = vunpack.c.h.b16 %v260
    %v792 = vunpack.c.l.b16 %v261
    %v793 = vunpack.c.h.b16 %v261
    %v794 = vunpack.c.l.b16 %v262
    %v795 = vunpack.c.h.b16 %v262
    %v796 = vunpack.c.l.b16 %v263
    %v797 = vunpack.c.h.b16 %v263
    %v798 = vunpack.c.l.b16 %v264
    %v799 = vunpack.c.h.b16 %v264
    %v800 = vunpack.c.l.b16 %v265
    %v801 = vunpack.c.h.b16 %v265
    %v802 = vunpack.c.l.b16 %v266
    %v803 = vunpack.c.h.b16 %v266
    %v804 = vunpack.c.l.b16 %v267
    %v805 = vunpack.c.h.b16 %v267
    %v806 = vunpack.c.l.b16 %v268
    %v807 = vunpack.c.h.b16 %v268
    %v808 = vunpack.c.l.b16 %v269
    %v809 = vunpack.c.h.b16 %v269
    %v810 = vunpack.c.l.b16 %v270
    %v811 = vunpack.c.h.b16 %v270
    %v812 = vunpack.c.l.b16 %v271
    %v813 = vunpack.c.h.b16 %v271
    %v814 = vunpack.c.l.b16 %v272
    %v815 = vunpack.c.h.b16 %v272
    %v816 = vunpack.c.l.b16 %v273
    %v817 = vunpack.c.h.b16 %v273
    %v818 = vunpack.c.l.b16 %v274
    %v819 = vunpack.c.h.b16 %v274
    %v820 = vunpack.c.l.b16 %v275
    %v821 = vunpack.c.h.b16 %v275
    %v822 = vunpack.c.l.b16 %v276
    %v823 = vunpack.c.h.b16 %v276
    %v824 = vunpack.c.l.b16 %v277
    %v825 = vunpack.c.h.b16 %v277
    %v826 = vunpack.c.l.b16 %v278
    %v827 = vunpack.c.h.b16 %v278
    %v828 = vunpack.c.l.b16 %v279
    %v829 = vunpack.c.h.b16 %v279
    %v830 = vunpack.c.l.b16 %v280
    %v831 = vunpack.c.h.b16 %v280
    %v832 = vunpack.c.l.b16 %v281
    %v833 = vunpack.c.h.b16 %v281
    %v834 = vunpack.c.l.b16 %v282
    %v835 = vunpack.c.h.b16 %v282
    %v836 = vunpack.c.l.b16 %v283
    %v837 = vunpack.c.h.b16 %v283
    %v838 = vunpack.c.l.b16 %v284
    %v839 = vunpack.c.h.b16 %v284
    %v840 = vunpack.c.l.b16 %v285
    %v841 = vunpack.c.h.b16 %v285
    %v842 = vunpack.c.l.b16 %v286
    %v843 = vunpack.c.h.b16 %v286
    %v844 = vunpack.c.l.b16 %v287
    %v845 = vunpack.c.h.b16 %v287
    %v846 = vunpack.c.l.b16 %v288
    %v847 = vunpack.c.h.b16 %v288
    %v848 = vunpack.c.l.b16 %v289
    %v849 = vunpack.c.h.b16 %v289
    %v850 = vunpack.c.l.b16 %v290
    %v851 = vunpack.c.h.b16 %v290
    %v852 = vunpack.c.l.b16 %v291
    %v853 = vunpack.c.h.b16 %v291
    %v854 = vunpack.c.l.b16 %v292
    %v855 = vunpack.c.h.b16 %v292
    %v856 = vunpack.c.l.b16 %v293
    %v857 = vunpack.c.h.b16 %v293
    %v858 = vunpack.c.l.b16 %v294
    %v859 = vunpack.c.h.b16 %v294
    %v860 = vunpack.c.l.b16 %v295
    %v861 = vunpack.c.h.b16 %v295
    %v862 = vunpack.c.l.b16 %v296
    %v863 = vunpack.c.h.b16 %v296
    %v864 = vunpack.c.l.b16 %v297
    %v865 = vunpack.c.h.b16 %v297
    %v866 = vunpack.c.l.b16 %v298
    %v867 = vunpack.c.h.b16 %v298
    %v868 = vunpack.c.l.b16 %v299
    %v869 = vunpack.c.h.b16 %v299
    %v870 = vunpack.c.l.b16 %v300
    %v871 = vunpack.c.h.b16 %v300
    %v872 = vunpack.c.l.b16 %v301
    %v873 = vunpack.c.h.b16 %v301
    %v874 = vunpack.c.l.b16 %v302
    %v875 = vunpack.c.h.b16 %v302
    %v876 = vunpack.c.l.b16 %v303
    %v877 = vunpack.c.h.b16 %v303
    %v878 = vunpack.c.l.b16 %v304
    %v879 = vunpack.c.h.b16 %v304
    %v880 = vunpack.c.l.b16 %v305
    %v881 = vunpack.c.h.b16 %v305
    %v882 = vunpack.c.l.b16 %v306
    %v883 = vunpack.c.h.b16 %v306
    %v884 = vunpack.c.l.b16 %v307
    %v885 = vunpack.c.h.b16 %v307
    %v886 = vunpack.c.l.b16 %v308
    %v887 = vunpack.c.h.b16 %v308
    %v888 = vunpack.c.l.b16 %v309
    %v889 = vunpack.c.h.b16 %v309
    %v890 = vunpack.c.l.b16 %v310
    %v891 = vunpack.c.h.b16 %v310
    %v892 = vunpack.c.l.b16 %v311
    %v893 = vunpack.c.h.b16 %v311
    %v894 = vunpack.c.l.b16 %v312
    %v895 = vunpack.c.h.b16 %v312
    %v896 = vunpack.c.l.b16 %v313
    %v897 = vunpack.c.h.b16 %v313
    %v898 = vunpack.c.l.b16 %v314
    %v899 = vunpack.c.h.b16 %v314
    %v900 = vunpack.c.l.b16 %v315
    %v901 = vunpack.c.h.b16 %v315
    %v902 = vunpack.c.l.b16 %v316
    %v903 = vunpack.c.h.b16 %v316
    %v904 = vunpack.c.l.b16 %v317
    %v905 = vunpack.c.h.b16 %v317
    %v906 = vunpack.c.l.b16 %v318
    %v907 = vunpack.c.h.b16 %v318
    %v908 = vunpack.c.l.b16 %v319
    %v909 = vunpack.c.h.b16 %v319
    %v910 = vunpack.c.l.b16 %v320
    %v911 = vunpack.c.h.b16 %v320
    %v912 = vunpack.c.l.b16 %v321
    %v913 = vunpack.c.h.b16 %v321
    %v914 = vunpack.c.l.b16 %v322
    %v915 = vunpack.c.h.b16 %v322
    %v916 = vunpack.c.l.b16 %v323
    %v917 = vunpack.c.h.b16 %v323
    %v918 = vunpack.c.l.b16 %v324
    %v919 = vunpack.c.h.b16 %v324
    %v920 = vunpack.c.l.b16 %v325
    %v921 = vunpack.c.h.b16 %v325
    %v922 = vunpack.c.l.b16 %v326
    %v923 = vunpack.c.h.b16 %v326
    %v924 = vunpack.c.l.b16 %v327
    %v925 = vunpack.c.h.b16 %v327
    %v926 = vpack.c.b16 %v538, %v534
    %v927 = vpack.c.b16 %v539, %v535
    %v928 = vpack.c.b16 %v540, %v536
    %v929 = vpack.c.b16 %v541, %v537
    %v930 = vpack.c.b16 %v546, %v542
    %v931 = vpack.c.b16 %v547, %v543
    %v932 = vpack.c.b16 %v548, %v544
    %v933 = vpack.c.b16 %v549, %v545
    %v934 = vpack.c.b16 %v554, %v550
    %v935 = vpack.c.b16 %v555, %v551
    %v936 = vpack.c.b16 %v556, %v552
    %v937 = vpack.c.b16 %v557, %v553
    %v938 = vpack.c.b16 %v562, %v558
    %v939 = vpack.c.b16 %v563, %v559
    %v940 = vpack.c.b16 %v564, %v560
    %v941 = vpack.c.b16 %v565, %v561
    %v942 = vpack.c.b16 %v570, %v566
    %v943 = vpack.c.b16 %v571, %v567
    %v944 = vpack.c.b16 %v572, %v568
    %v945 = vpack.c.b16 %v573, %v569
    %v946 = vpack.c.b16 %v578, %v574
    %v947 = vpack.c.b16 %v579, %v575
    %v948 = vpack.c.b16 %v580, %v576
    %v949 = vpack.c.b16 %v581, %v577
    %v950 = vpack.c.b16 %v586, %v582
    %v951 = vpack.c.b16 %v587, %v583
    %v952 = vpack.c.b16 %v588, %v584
    %v953 = vpack.c.b16 %v589, %v585
    %v954 = vpack.c.b16 %v594, %v590
    %v955 = vpack.c.b16 %v595, %v591
    %v956 = vpack.c.b16 %v596, %v592
    %v957 = vpack.c.b16 %v597, %v593
    %v958 = vpack.c.b16 %v602, %v598
    %v959 = vpack.c.b16 %v603, %v599
    %v960 = vpack.c.b16 %v604, %v600
    %v961 = vpack.c.b16 %v605, %v601
    %v962 = vpack.c.b16 %v610, %v606
    %v963 = vpack.c.b16 %v611, %v607
    %v964 = vpack.c.b16 %v612, %v608
    %v965 = vpack.c.b16 %v613, %v609
    %v966 = vpack.c.b16 %v618, %v614
    %v967 = vpack.c.b16 %v619, %v615
    %v968 = vpack.c.b16 %v620, %v616
    %v969 = vpack.c.b16 %v621, %v617
    %v970 = vpack.c.b16 %v626, %v622
    %v971 = vpack.c.b16 %v627, %v623
    %v972 = vpack.c.b16 %v628, %v624
    %v973 = vpack.c.b16 %v629, %v625
    %v974 = vpack.c.b16 %v634, %v630
    %v975 = vpack.c.b16 %v635, %v631
    %v976 = vpack.c.b16 %v636, %v632
    %v977 = vpack.c.b16 %v637, %v633
    %v978 = vpack.c.b16 %v642, %v638
    %v979 = vpack.c.b16 %v643, %v639
    %v980 = vpack.c.b16 %v644, %v640
    %v981 = vpack.c.b16 %v645, %v641
    %v982 = vpack.c.b16 %v650, %v646
    %v983 = vpack.c.b16 %v651, %v647
    %v984 = vpack.c.b16 %v652, %v648
    %v985 = vpack.c.b16 %v653, %v649
    %v986 = vpack.c.b16 %v658, %v654
    %v987 = vpack.c.b16 %v659, %v655
    %v988 = vpack.c.b16 %v660, %v656
    %v989 = vpack.c.b16 %v661, %v657
    %v990 = vpack.c.b16 %v666, %v662
    %v991 = vpack.c.b16 %v667, %v663
    %v992 = vpack.c.b16 %v668, %v664
    %v993 = vpack.c.b16 %v669, %v665
    %v994 = vpack.c.b16 %v674, %v670
    %v995 = vpack.c.b16 %v675, %v671
    %v996 = vpack.c.b16 %v676, %v672
    %v997 = vpack.c.b16 %v677, %v673
    %v998 = vpack.c.b16 %v682, %v678
    %v999 = vpack.c.b16 %v683, %v679
    %v1000 = vpack.c.b16 %v684, %v680
    %v1001 = vpack.c.b16 %v685, %v681
    %v1002 = vpack.c.b16 %v690, %v686
    %v1003 = vpack.c.b16 %v691, %v687
    %v1004 = vpack.c.b16 %v692, %v688
    %v1005 = vpack.c.b16 %v693, %v689
    %v1006 = vpack.c.b16 %v698, %v694
    %v1007 = vpack.c.b16 %v699, %v695
    %v1008 = vpack.c.b16 %v700, %v696
    %v1009 = vpack.c.b16 %v701, %v697
    %v1010 = vpack.c.b16 %v706, %v702
    %v1011 = vpack.c.b16 %v707, %v703
    %v1012 = vpack.c.b16 %v708, %v704
    %v1013 = vpack.c.b16 %v709, %v705
    %v1014 = vpack.c.b16 %v714, %v710
    %v1015 = vpack.c.b16 %v715, %v711
    %v1016 = vpack.c.b16 %v716, %v712
    %v1017 = vpack.c.b16 %v717, %v713
    %v1018 = vpack.c.b16 %v722, %v718
    %v1019 = vpack.c.b16 %v723, %v719
    %v1020 = vpack.c.b16 %v724, %v720
    %v1021 = vpack.c.b16 %v725, %v721
    %v1022 = vpack.c.b16 %v730, %v726
    %v1023 = vpack.c.b16 %v731, %v727
    %v1024 = vpack.c.b16 %v732, %v728
    %v1025 = vpack.c.b16 %v733, %v729
    %v1026 = vpack.c.b16 %v738, %v734
    %v1027 = vpack.c.b16 %v739, %v735
    %v1028 = vpack.c.b16 %v740, %v736
    %v1029 = vpack.c.b16 %v741, %v737
    %v1030 = vpack.c.b16 %v746, %v742
    %v1031 = vpack.c.b16 %v747, %v743
    %v1032 = vpack.c.b16 %v748, %v744
    %v1033 = vpack.c.b16 %v749, %v745
    %v1034 = vpack.c.b16 %v754, %v750
    %v1035 = vpack.c.b16 %v755, %v751
    %v1036 = vpack.c.b16 %v756, %v752
    %v1037 = vpack.c.b16 %v757, %v753
    %v1038 = vpack.c.b16 %v762, %v758
    %v1039 = vpack.c.b16 %v763, %v759
    %v1040 = vpack.c.b16 %v764, %v760
    %v1041 = vpack.c.b16 %v765, %v761
    %v1042 = vpack.c.b16 %v770, %v766
    %v1043 = vpack.c.b16 %v771, %v767
    %v1044 = vpack.c.b16 %v772, %v768
    %v1045 = vpack.c.b16 %v773, %v769
    %v1046 = vpack.c.b16 %v778, %v774
    %v1047 = vpack.c.b16 %v779, %v775
    %v1048 = vpack.c.b16 %v780, %v776
    %v1049 = vpack.c.b16 %v781, %v777
    %v1050 = vpack.c.b16 %v786, %v782
    %v1051 = vpack.c.b16 %v787, %v783
    %v1052 = vpack.c.b16 %v788, %v784
    %v1053 = vpack.c.b16 %v789, %v785
    %v1054 = vpack.c.b16 %v794, %v790
    %v1055 = vpack.c.b16 %v795, %v791
    %v1056 = vpack.c.b16 %v796, %v792
    %v1057 = vpack.c.b16 %v797, %v793
    %v1058 = vpack.c.b16 %v802, %v798
    %v1059 = vpack.c.b16 %v803, %v799
    %v1060 = vpack.c.b16 %v804, %v800
    %v1061 = vpack.c.b16 %v805, %v801
    %v1062 = vpack.c.b16 %v810, %v806
    %v1063 = vpack.c.b16 %v811, %v807
    %v1064 = vpack.c.b16 %v812, %v808
    %v1065 = vpack.c.b16 %v813, %v809
    %v1066 = vpack.c.b16 %v818, %v814
    %v1067 = vpack.c.b16 %v819, %v815
    %v1068 = vpack.c.b16 %v820, %v816
    %v1069 = vpack.c.b16 %v821, %v817
    %v1070 = vpack.c.b16 %v826, %v822
    %v1071 = vpack.c.b16 %v827, %v823
    %v1072 = vpack.c.b16 %v828, %v824
    %v1073 = vpack.c.b16 %v829, %v825
    %v1074 = vpack.c.b16 %v834, %v830
    %v1075 = vpack.c.b16 %v835, %v831
    %v1076 = vpack.c.b16 %v836, %v832
    %v1077 = vpack.c.b16 %v837, %v833
    %v1078 = vpack.c.b16 %v842, %v838
    %v1079 = vpack.c.b16 %v843, %v839
    %v1080 = vpack.c.b16 %v844, %v840
    %v1081 = vpack.c.b16 %v845, %v841
    %v1082 = vpack.c.b16 %v850, %v846
    %v1083 = vpack.c.b16 %v851, %v847
    %v1084 = vpack.c.b16 %v852, %v848
    %v1085 = vpack.c.b16 %v853, %v849
    %v1086 = vpack.c.b16 %v858, %v854
    %v1087 = vpack.c.b16 %v859, %v855
    %v1088 = vpack.c.b16 %v860, %v856
    %v1089 = vpack.c.b16 %v861, %v857
    %v1090 = vpack.c.b16 %v866, %v862
    %v1091 = vpack.c.b16 %v867, %v863
    %v1092 = vpack.c.b16 %v868, %v864
    %v1093 = vpack.c.b16 %v869, %v865
    %v1094 = vpack.c.b16 %v874, %v870
    %v1095 = vpack.c.b16 %v875, %v871
    %v1096 = vpack.c.b16 %v876, %v872
    %v1097 = vpack.c.b16 %v877, %v873
    %v1098 = vpack.c.b16 %v882, %v878
    %v1099 = vpack.c.b16 %v883, %v879
    %v1100 = vpack.c.b16 %v884, %v880
    %v1101 = vpack.c.b16 %v885, %v881
    %v1102 = vpack.c.b16 %v890, %v886
    %v1103 = vpack.c.b16 %v891, %v887
    %v1104 = vpack.c.b16 %v892, %v888
    %v1105 = vpack.c.b16 %v893, %v889
    %v1106 = vpack.c.b16 %v898, %v894
    %v1107 = vpack.c.b16 %v899, %v895
    %v1108 = vpack.c.b16 %v900, %v896
    %v1109 = vpack.c.b16 %v901, %v897
    %v1110 = vpack.c.b16 %v906, %v902
    %v1111 = vpack.c.b16 %v907, %v903
    %v1112 = vpack.c.b16 %v908, %v904
    %v1113 = vpack.c.b16 %v909, %v905
    %v1114 = vpack.c.b16 %v914, %v910
    %v1115 = vpack.c.b16 %v915, %v911
    %v1116 = vpack.c.b16 %v916, %v912
    %v1117 = vpack.c.b16 %v917, %v913
    %v1118 = vpack.c.b16 %v922, %v918
    %v1119 = vpack.c.b16 %v923, %v919
    %v1120 = vpack.c.b16 %v924, %v920
    %v1121 = vpack.c.b16 %v925, %v921
    %vm1318 = vcmask 130048
    %v1320 = vsel %vm1318, %v131, 0
    %1322 = vmatpush.bf16.msra.mxu0 %v954
    %1323 = vmatpush.bf16.msra.mxu0 %v950
    %1324 = vmatpush.bf16.msra.mxu0 %v946
    %1325 = vmatpush.bf16.msra.mxu0 %v942
    %1326 = vmatpush.bf16.msra.mxu0 %v938
    %1327 = vmatpush.bf16.msra.mxu0 %v934
    %1328 = vmatpush.bf16.msra.mxu0 %v930
    %1329 = vmatpush.bf16.msra.mxu0 %v926
    %1330 = vmatmul.bf16.gmra.mxu0 %v125
    %v1331 = vpop.f32.mrf.mxu0
    %v1332 = vadd.f32 %v330, %v1331
    %v1333 = vpop.f32.mrf.mxu0
    %v1334 = vadd.f32 %v330, %v1333
    %1335 = vdwg.mxu0
    %1336 = vmatpush.bf16.msra.mxu0 %v986
    %1337 = vmatpush.bf16.msra.mxu0 %v982
    %1338 = vmatpush.bf16.msra.mxu0 %v978
    %1339 = vmatpush.bf16.msra.mxu0 %v974
    %1340 = vmatpush.bf16.msra.mxu0 %v970
    %1341 = vmatpush.bf16.msra.mxu0 %v966
    %1342 = vmatpush.bf16.msra.mxu0 %v962
    %1343 = vmatpush.bf16.msra.mxu0 %v958
    %1344 = vmatmul.bf16.gmra.mxu0 %v126
    %v1345 = vpop.f32.mrf.mxu0
    %v1346 = vadd.f32 %v1332, %v1345
    %v1347 = vpop.f32.mrf.mxu0
    %v1348 = vadd.f32 %v1334, %v1347
    %1349 = vdwg.mxu0
    %1350 = vmatpush.bf16.msra.mxu0 %v1018
    %1351 = vmatpush.bf16.msra.mxu0 %v1014
    %1352 = vmatpush.bf16.msra.mxu0 %v1010
    %1353 = vmatpush.bf16.msra.mxu0 %v1006
    %1354 = vmatpush.bf16.msra.mxu0 %v1002
    %1355 = vmatpush.bf16.msra.mxu0 %v998
    %1356 = vmatpush.bf16.msra.mxu0 %v994
    %1357 = vmatpush.bf16.msra.mxu0 %v990
    %1358 = vmatmul.bf16.gmra.mxu0 %v127
    %v1359 = vpop.f32.mrf.mxu0
    %v1360 = vadd.f32 %v1346, %v1359
    %v1361 = vpop.f32.mrf.mxu0
    %v1362 = vadd.f32 %v1348, %v1361
    %1363 = vdwg.mxu0
    %1364 = vmatpush.bf16.msra.mxu0 %v1050
    %1365 = vmatpush.bf16.msra.mxu0 %v1046
    %1366 = vmatpush.bf16.msra.mxu0 %v1042
    %1367 = vmatpush.bf16.msra.mxu0 %v1038
    %1368 = vmatpush.bf16.msra.mxu0 %v1034
    %1369 = vmatpush.bf16.msra.mxu0 %v1030
    %1370 = vmatpush.bf16.msra.mxu0 %v1026
    %1371 = vmatpush.bf16.msra.mxu0 %v1022
    %1372 = vmatmul.bf16.gmra.mxu0 %v128
    %v1373 = vpop.f32.mrf.mxu0
    %v1374 = vadd.f32 %v1360, %v1373
    %v1375 = vpop.f32.mrf.mxu0
    %v1376 = vadd.f32 %v1362, %v1375
    %1377 = vdwg.mxu0
    %1378 = vmatpush.bf16.msra.mxu0 %v1082
    %1379 = vmatpush.bf16.msra.mxu0 %v1078
    %1380 = vmatpush.bf16.msra.mxu0 %v1074
    %1381 = vmatpush.bf16.msra.mxu0 %v1070
    %1382 = vmatpush.bf16.msra.mxu0 %v1066
    %1383 = vmatpush.bf16.msra.mxu0 %v1062
    %1384 = vmatpush.bf16.msra.mxu0 %v1058
    %1385 = vmatpush.bf16.msra.mxu0 %v1054
    %1386 = vmatmul.bf16.gmra.mxu0 %v129
    %v1387 = vpop.f32.mrf.mxu0
    %v1388 = vadd.f32 %v1374, %v1387
    %v1389 = vpop.f32.mrf.mxu0
    %v1390 = vadd.f32 %v1376, %v1389
    %1391 = vdwg.mxu0
    %1392 = vmatpush.bf16.msra.mxu0 %v1114
    %1393 = vmatpush.bf16.msra.mxu0 %v1110
    %1394 = vmatpush.bf16.msra.mxu0 %v1106
    %1395 = vmatpush.bf16.msra.mxu0 %v1102
    %1396 = vmatpush.bf16.msra.mxu0 %v1098
    %1397 = vmatpush.bf16.msra.mxu0 %v1094
    %1398 = vmatpush.bf16.msra.mxu0 %v1090
    %1399 = vmatpush.bf16.msra.mxu0 %v1086
    %1400 = vmatmul.bf16.gmra.mxu0 %v130
    %v1401 = vpop.f32.mrf.mxu0
    %v1402 = vadd.f32 %v1388, %v1401
    %v1403 = vpop.f32.mrf.mxu0
    %v1404 = vadd.f32 %v1390, %v1403
    %1405 = vdwg.mxu0
    %1406 = vmatpush.bf16.msra.mxu0 0
    %1407 = vmatpush.bf16.msra.mxu0 0
    %1408 = vmatpush.bf16.msra.mxu0 0
    %1409 = vmatpush.bf16.msra.mxu0 0
    %1410 = vmatpush.bf16.msra.mxu0 0
    %1411 = vmatpush.bf16.msra.mxu0 0
    %1412 = vmatpush.bf16.msra.mxu0 0
    %1413 = vmatpush.bf16.msra.mxu0 %v1118
    %1414 = vmatmul.bf16.gmra.mxu0 %v1320
    %v1415 = vpop.f32.mrf.mxu0
    %v1416 = vadd.f32 %v1402, %v1415
    %v1417 = vpop.f32.mrf.mxu0
    %v1418 = vadd.f32 %v1404, %v1417
    %1419 = vdwg.mxu0
    %1420 = vmatpush.bf16.msra.mxu0 %v955
    %1421 = vmatpush.bf16.msra.mxu0 %v951
    %1422 = vmatpush.bf16.msra.mxu0 %v947
    %1423 = vmatpush.bf16.msra.mxu0 %v943
    %1424 = vmatpush.bf16.msra.mxu0 %v939
    %1425 = vmatpush.bf16.msra.mxu0 %v935
    %1426 = vmatpush.bf16.msra.mxu0 %v931
    %1427 = vmatpush.bf16.msra.mxu0 %v927
    %1428 = vmatmul.bf16.gmra.mxu0 %v125
    %v1429 = vpop.f32.mrf.mxu0
    %v1430 = vadd.f32 %v331, %v1429
    %v1431 = vpop.f32.mrf.mxu0
    %v1432 = vadd.f32 %v331, %v1431
    %1433 = vdwg.mxu0
    %1434 = vmatpush.bf16.msra.mxu0 %v987
    %1435 = vmatpush.bf16.msra.mxu0 %v983
    %1436 = vmatpush.bf16.msra.mxu0 %v979
    %1437 = vmatpush.bf16.msra.mxu0 %v975
    %1438 = vmatpush.bf16.msra.mxu0 %v971
    %1439 = vmatpush.bf16.msra.mxu0 %v967
    %1440 = vmatpush.bf16.msra.mxu0 %v963
    %1441 = vmatpush.bf16.msra.mxu0 %v959
    %1442 = vmatmul.bf16.gmra.mxu0 %v126
    %v1443 = vpop.f32.mrf.mxu0
    %v1444 = vadd.f32 %v1430, %v1443
    %v1445 = vpop.f32.mrf.mxu0
    %v1446 = vadd.f32 %v1432, %v1445
    %1447 = vdwg.mxu0
    %1448 = vmatpush.bf16.msra.mxu0 %v1019
    %1449 = vmatpush.bf16.msra.mxu0 %v1015
    %1450 = vmatpush.bf16.msra.mxu0 %v1011
    %1451 = vmatpush.bf16.msra.mxu0 %v1007
    %1452 = vmatpush.bf16.msra.mxu0 %v1003
    %1453 = vmatpush.bf16.msra.mxu0 %v999
    %1454 = vmatpush.bf16.msra.mxu0 %v995
    %1455 = vmatpush.bf16.msra.mxu0 %v991
    %1456 = vmatmul.bf16.gmra.mxu0 %v127
    %v1457 = vpop.f32.mrf.mxu0
    %v1458 = vadd.f32 %v1444, %v1457
    %v1459 = vpop.f32.mrf.mxu0
    %v1460 = vadd.f32 %v1446, %v1459
    %1461 = vdwg.mxu0
    %1462 = vmatpush.bf16.msra.mxu0 %v1051
    %1463 = vmatpush.bf16.msra.mxu0 %v1047
    %1464 = vmatpush.bf16.msra.mxu0 %v1043
    %1465 = vmatpush.bf16.msra.mxu0 %v1039
    %1466 = vmatpush.bf16.msra.mxu0 %v1035
    %1467 = vmatpush.bf16.msra.mxu0 %v1031
    %1468 = vmatpush.bf16.msra.mxu0 %v1027
    %1469 = vmatpush.bf16.msra.mxu0 %v1023
    %1470 = vmatmul.bf16.gmra.mxu0 %v128
    %v1471 = vpop.f32.mrf.mxu0
    %v1472 = vadd.f32 %v1458, %v1471
    %v1473 = vpop.f32.mrf.mxu0
    %v1474 = vadd.f32 %v1460, %v1473
    %1475 = vdwg.mxu0
    %1476 = vmatpush.bf16.msra.mxu0 %v1083
    %1477 = vmatpush.bf16.msra.mxu0 %v1079
    %1478 = vmatpush.bf16.msra.mxu0 %v1075
    %1479 = vmatpush.bf16.msra.mxu0 %v1071
    %1480 = vmatpush.bf16.msra.mxu0 %v1067
    %1481 = vmatpush.bf16.msra.mxu0 %v1063
    %1482 = vmatpush.bf16.msra.mxu0 %v1059
    %1483 = vmatpush.bf16.msra.mxu0 %v1055
    %1484 = vmatmul.bf16.gmra.mxu0 %v129
    %v1485 = vpop.f32.mrf.mxu0
    %v1486 = vadd.f32 %v1472, %v1485
    %v1487 = vpop.f32.mrf.mxu0
    %v1488 = vadd.f32 %v1474, %v1487
    %1489 = vdwg.mxu0
    %1490 = vmatpush.bf16.msra.mxu0 %v1115
    %1491 = vmatpush.bf16.msra.mxu0 %v1111
    %1492 = vmatpush.bf16.msra.mxu0 %v1107
    %1493 = vmatpush.bf16.msra.mxu0 %v1103
    %1494 = vmatpush.bf16.msra.mxu0 %v1099
    %1495 = vmatpush.bf16.msra.mxu0 %v1095
    %1496 = vmatpush.bf16.msra.mxu0 %v1091
    %1497 = vmatpush.bf16.msra.mxu0 %v1087
    %1498 = vmatmul.bf16.gmra.mxu0 %v130
    %v1499 = vpop.f32.mrf.mxu0
    %v1500 = vadd.f32 %v1486, %v1499
    %v1501 = vpop.f32.mrf.mxu0
    %v1502 = vadd.f32 %v1488, %v1501
    %1503 = vdwg.mxu0
    %1504 = vmatpush.bf16.msra.mxu0 0
    %1505 = vmatpush.bf16.msra.mxu0 0
    %1506 = vmatpush.bf16.msra.mxu0 0
    %1507 = vmatpush.bf16.msra.mxu0 0
    %1508 = vmatpush.bf16.msra.mxu0 0
    %1509 = vmatpush.bf16.msra.mxu0 0
    %1510 = vmatpush.bf16.msra.mxu0 0
    %1511 = vmatpush.bf16.msra.mxu0 %v1119
    %1512 = vmatmul.bf16.gmra.mxu0 %v1320
    %v1513 = vpop.f32.mrf.mxu0
    %v1514 = vadd.f32 %v1500, %v1513
    %v1515 = vpop.f32.mrf.mxu0
    %v1516 = vadd.f32 %v1502, %v1515
    %1517 = vdwg.mxu0
    %1518 = vmatpush.bf16.msra.mxu0 %v956
    %1519 = vmatpush.bf16.msra.mxu0 %v952
    %1520 = vmatpush.bf16.msra.mxu0 %v948
    %1521 = vmatpush.bf16.msra.mxu0 %v944
    %1522 = vmatpush.bf16.msra.mxu0 %v940
    %1523 = vmatpush.bf16.msra.mxu0 %v936
    %1524 = vmatpush.bf16.msra.mxu0 %v932
    %1525 = vmatpush.bf16.msra.mxu0 %v928
    %1526 = vmatmul.bf16.gmra.mxu0 %v125
    %v1527 = vpop.f32.mrf.mxu0
    %v1528 = vadd.f32 %v332, %v1527
    %v1529 = vpop.f32.mrf.mxu0
    %v1530 = vadd.f32 %v332, %v1529
    %1531 = vdwg.mxu0
    %1532 = vmatpush.bf16.msra.mxu0 %v988
    %1533 = vmatpush.bf16.msra.mxu0 %v984
    %1534 = vmatpush.bf16.msra.mxu0 %v980
    %1535 = vmatpush.bf16.msra.mxu0 %v976
    %1536 = vmatpush.bf16.msra.mxu0 %v972
    %1537 = vmatpush.bf16.msra.mxu0 %v968
    %1538 = vmatpush.bf16.msra.mxu0 %v964
    %1539 = vmatpush.bf16.msra.mxu0 %v960
    %1540 = vmatmul.bf16.gmra.mxu0 %v126
    %v1541 = vpop.f32.mrf.mxu0
    %v1542 = vadd.f32 %v1528, %v1541
    %v1543 = vpop.f32.mrf.mxu0
    %v1544 = vadd.f32 %v1530, %v1543
    %1545 = vdwg.mxu0
    %1546 = vmatpush.bf16.msra.mxu0 %v1020
    %1547 = vmatpush.bf16.msra.mxu0 %v1016
    %1548 = vmatpush.bf16.msra.mxu0 %v1012
    %1549 = vmatpush.bf16.msra.mxu0 %v1008
    %1550 = vmatpush.bf16.msra.mxu0 %v1004
    %1551 = vmatpush.bf16.msra.mxu0 %v1000
    %1552 = vmatpush.bf16.msra.mxu0 %v996
    %1553 = vmatpush.bf16.msra.mxu0 %v992
    %1554 = vmatmul.bf16.gmra.mxu0 %v127
    %v1555 = vpop.f32.mrf.mxu0
    %v1556 = vadd.f32 %v1542, %v1555
    %v1557 = vpop.f32.mrf.mxu0
    %v1558 = vadd.f32 %v1544, %v1557
    %1559 = vdwg.mxu0
    %1560 = vmatpush.bf16.msra.mxu0 %v1052
    %1561 = vmatpush.bf16.msra.mxu0 %v1048
    %1562 = vmatpush.bf16.msra.mxu0 %v1044
    %1563 = vmatpush.bf16.msra.mxu0 %v1040
    %1564 = vmatpush.bf16.msra.mxu0 %v1036
    %1565 = vmatpush.bf16.msra.mxu0 %v1032
    %1566 = vmatpush.bf16.msra.mxu0 %v1028
    %1567 = vmatpush.bf16.msra.mxu0 %v1024
    %1568 = vmatmul.bf16.gmra.mxu0 %v128
    %v1569 = vpop.f32.mrf.mxu0
    %v1570 = vadd.f32 %v1556, %v1569
    %v1571 = vpop.f32.mrf.mxu0
    %v1572 = vadd.f32 %v1558, %v1571
    %1573 = vdwg.mxu0
    %1574 = vmatpush.bf16.msra.mxu0 %v1084
    %1575 = vmatpush.bf16.msra.mxu0 %v1080
    %1576 = vmatpush.bf16.msra.mxu0 %v1076
    %1577 = vmatpush.bf16.msra.mxu0 %v1072
    %1578 = vmatpush.bf16.msra.mxu0 %v1068
    %1579 = vmatpush.bf16.msra.mxu0 %v1064
    %1580 = vmatpush.bf16.msra.mxu0 %v1060
    %1581 = vmatpush.bf16.msra.mxu0 %v1056
    %1582 = vmatmul.bf16.gmra.mxu0 %v129
    %v1583 = vpop.f32.mrf.mxu0
    %v1584 = vadd.f32 %v1570, %v1583
    %v1585 = vpop.f32.mrf.mxu0
    %v1586 = vadd.f32 %v1572, %v1585
    %1587 = vdwg.mxu0
    %1588 = vmatpush.bf16.msra.mxu0 %v1116
    %1589 = vmatpush.bf16.msra.mxu0 %v1112
    %1590 = vmatpush.bf16.msra.mxu0 %v1108
    %1591 = vmatpush.bf16.msra.mxu0 %v1104
    %1592 = vmatpush.bf16.msra.mxu0 %v1100
    %1593 = vmatpush.bf16.msra.mxu0 %v1096
    %1594 = vmatpush.bf16.msra.mxu0 %v1092
    %1595 = vmatpush.bf16.msra.mxu0 %v1088
    %1596 = vmatmul.bf16.gmra.mxu0 %v130
    %v1597 = vpop.f32.mrf.mxu0
    %v1598 = vadd.f32 %v1584, %v1597
    %v1599 = vpop.f32.mrf.mxu0
    %v1600 = vadd.f32 %v1586, %v1599
    %1601 = vdwg.mxu0
    %1602 = vmatpush.bf16.msra.mxu0 0
    %1603 = vmatpush.bf16.msra.mxu0 0
    %1604 = vmatpush.bf16.msra.mxu0 0
    %1605 = vmatpush.bf16.msra.mxu0 0
    %1606 = vmatpush.bf16.msra.mxu0 0
    %1607 = vmatpush.bf16.msra.mxu0 0
    %1608 = vmatpush.bf16.msra.mxu0 0
    %1609 = vmatpush.bf16.msra.mxu0 %v1120
    %1610 = vmatmul.bf16.gmra.mxu0 %v1320
    %v1611 = vpop.f32.mrf.mxu0
    %v1612 = vadd.f32 %v1598, %v1611
    %v1613 = vpop.f32.mrf.mxu0
    %v1614 = vadd.f32 %v1600, %v1613
    %1615 = vdwg.mxu0
    %1616 = vmatpush.bf16.msra.mxu0 %v957
    %1617 = vmatpush.bf16.msra.mxu0 %v953
    %1618 = vmatpush.bf16.msra.mxu0 %v949
    %1619 = vmatpush.bf16.msra.mxu0 %v945
    %1620 = vmatpush.bf16.msra.mxu0 %v941
    %1621 = vmatpush.bf16.msra.mxu0 %v937
    %1622 = vmatpush.bf16.msra.mxu0 %v933
    %1623 = vmatpush.bf16.msra.mxu0 %v929
    %1624 = vmatmul.bf16.gmra.mxu0 %v125
    %v1625 = vpop.f32.mrf.mxu0
    %v1626 = vadd.f32 %v333, %v1625
    %v1627 = vpop.f32.mrf.mxu0
    %v1628 = vadd.f32 %v333, %v1627
    %1629 = vdwg.mxu0
    %1630 = vmatpush.bf16.msra.mxu0 %v989
    %1631 = vmatpush.bf16.msra.mxu0 %v985
    %1632 = vmatpush.bf16.msra.mxu0 %v981
    %1633 = vmatpush.bf16.msra.mxu0 %v977
    %1634 = vmatpush.bf16.msra.mxu0 %v973
    %1635 = vmatpush.bf16.msra.mxu0 %v969
    %1636 = vmatpush.bf16.msra.mxu0 %v965
    %1637 = vmatpush.bf16.msra.mxu0 %v961
    %1638 = vmatmul.bf16.gmra.mxu0 %v126
    %v1639 = vpop.f32.mrf.mxu0
    %v1640 = vadd.f32 %v1626, %v1639
    %v1641 = vpop.f32.mrf.mxu0
    %v1642 = vadd.f32 %v1628, %v1641
    %1643 = vdwg.mxu0
    %1644 = vmatpush.bf16.msra.mxu0 %v1021
    %1645 = vmatpush.bf16.msra.mxu0 %v1017
    %1646 = vmatpush.bf16.msra.mxu0 %v1013
    %1647 = vmatpush.bf16.msra.mxu0 %v1009
    %1648 = vmatpush.bf16.msra.mxu0 %v1005
    %1649 = vmatpush.bf16.msra.mxu0 %v1001
    %1650 = vmatpush.bf16.msra.mxu0 %v997
    %1651 = vmatpush.bf16.msra.mxu0 %v993
    %1652 = vmatmul.bf16.gmra.mxu0 %v127
    %v1653 = vpop.f32.mrf.mxu0
    %v1654 = vadd.f32 %v1640, %v1653
    %v1655 = vpop.f32.mrf.mxu0
    %v1656 = vadd.f32 %v1642, %v1655
    %1657 = vdwg.mxu0
    %1658 = vmatpush.bf16.msra.mxu0 %v1053
    %1659 = vmatpush.bf16.msra.mxu0 %v1049
    %1660 = vmatpush.bf16.msra.mxu0 %v1045
    %1661 = vmatpush.bf16.msra.mxu0 %v1041
    %1662 = vmatpush.bf16.msra.mxu0 %v1037
    %1663 = vmatpush.bf16.msra.mxu0 %v1033
    %1664 = vmatpush.bf16.msra.mxu0 %v1029
    %1665 = vmatpush.bf16.msra.mxu0 %v1025
    %1666 = vmatmul.bf16.gmra.mxu0 %v128
    %v1667 = vpop.f32.mrf.mxu0
    %v1668 = vadd.f32 %v1654, %v1667
    %v1669 = vpop.f32.mrf.mxu0
    %v1670 = vadd.f32 %v1656, %v1669
    %1671 = vdwg.mxu0
    %1672 = vmatpush.bf16.msra.mxu0 %v1085
    %1673 = vmatpush.bf16.msra.mxu0 %v1081
    %1674 = vmatpush.bf16.msra.mxu0 %v1077
    %1675 = vmatpush.bf16.msra.mxu0 %v1073
    %1676 = vmatpush.bf16.msra.mxu0 %v1069
    %1677 = vmatpush.bf16.msra.mxu0 %v1065
    %1678 = vmatpush.bf16.msra.mxu0 %v1061
    %1679 = vmatpush.bf16.msra.mxu0 %v1057
    %1680 = vmatmul.bf16.gmra.mxu0 %v129
    %v1681 = vpop.f32.mrf.mxu0
    %v1682 = vadd.f32 %v1668, %v1681
    %v1683 = vpop.f32.mrf.mxu0
    %v1684 = vadd.f32 %v1670, %v1683
    %1685 = vdwg.mxu0
    %1686 = vmatpush.bf16.msra.mxu0 %v1117
    %1687 = vmatpush.bf16.msra.mxu0 %v1113
    %1688 = vmatpush.bf16.msra.mxu0 %v1109
    %1689 = vmatpush.bf16.msra.mxu0 %v1105
    %1690 = vmatpush.bf16.msra.mxu0 %v1101
    %1691 = vmatpush.bf16.msra.mxu0 %v1097
    %1692 = vmatpush.bf16.msra.mxu0 %v1093
    %1693 = vmatpush.bf16.msra.mxu0 %v1089
    %1694 = vmatmul.bf16.gmra.mxu0 %v130
    %v1695 = vpop.f32.mrf.mxu0
    %v1696 = vadd.f32 %v1682, %v1695
    %v1697 = vpop.f32.mrf.mxu0
    %v1698 = vadd.f32 %v1684, %v1697
    %1699 = vdwg.mxu0
    %1700 = vmatpush.bf16.msra.mxu0 0
    %1701 = vmatpush.bf16.msra.mxu0 0
    %1702 = vmatpush.bf16.msra.mxu0 0
    %1703 = vmatpush.bf16.msra.mxu0 0
    %1704 = vmatpush.bf16.msra.mxu0 0
    %1705 = vmatpush.bf16.msra.mxu0 0
    %1706 = vmatpush.bf16.msra.mxu0 0
    %1707 = vmatpush.bf16.msra.mxu0 %v1121
    %1708 = vmatmul.bf16.gmra.mxu0 %v1320
    %v1709 = vpop.f32.mrf.mxu0
    %v1710 = vadd.f32 %v1696, %v1709
    %v1711 = vpop.f32.mrf.mxu0
    %v1712 = vadd.f32 %v1698, %v1711
    %1713 = vdwg.mxu0
    %v1714 = vmax.f32 %v1416, 0.0
    %v1715 = vmax.f32 %v1514, 0.0
    %v1716 = vmax.f32 %v1612, 0.0
    %v1717 = vmax.f32 %v1710, 0.0
    %v1718 = vmax.f32 %v1418, 0.0
    %v1719 = vmax.f32 %v1516, 0.0
    %v1720 = vmax.f32 %v1614, 0.0
    %v1721 = vmax.f32 %v1712, 0.0
    %v1722 = vpack.c.bf16 %v1718, %v1714
    %v1723 = vpack.c.bf16 %v1719, %v1715
    %v1724 = vpack.c.bf16 %v1720, %v1716
    %v1725 = vpack.c.bf16 %v1721, %v1717
    %v1726 = vld [vmem:[#allocation8] sm:$0xff]
    %v1727 = vld [vmem:[#allocation8 + $0x8] sm:$0xff]
    %v1728 = vld [vmem:[#allocation8 + $0x10] sm:$0xff]
    %v1729 = vld [vmem:[#allocation8 + $0x18] sm:$0xff]
    %v1730 = vld [vmem:[#allocation8 + $0x20] sm:$0xff]
    %v1731 = vld [vmem:[#allocation8 + $0x28] sm:$0xff]
    %v1732 = vld [vmem:[#allocation8 + $0x30] sm:$0xff]
    %v1733 = vld [vmem:[#allocation8 + $0x38] sm:$0xff]
    %v1734 = vld [vmem:[#allocation8 + $0x40] sm:$0xff]
    %v1735 = vld [vmem:[#allocation8 + $0x48] sm:$0xff]
    %v1736 = vld [vmem:[#allocation8 + $0x50] sm:$0xff]
    %v1737 = vld [vmem:[#allocation8 + $0x58] sm:$0xff]
    %v1738 = vld [vmem:[#allocation8 + $0x60] sm:$0xff]
    %v1739 = vld [vmem:[#allocation8 + $0x68] sm:$0xff]
    %v1740 = vld [vmem:[#allocation8 + $0x70] sm:$0xff]
    %v1741 = vld [vmem:[#allocation8 + $0x78] sm:$0xff]
    %v1742 = vld [vmem:[#allocation8 + $0x80] sm:$0xff]
    %v1743 = vld [vmem:[#allocation8 + $0x88] sm:$0xff]
    %v1744 = vld [vmem:[#allocation8 + $0x90] sm:$0xff]
    %v1745 = vld [vmem:[#allocation8 + $0x98] sm:$0xff]
    %v1746 = vld [vmem:[#allocation8 + $0xa0] sm:$0xff]
    %v1747 = vld [vmem:[#allocation8 + $0xa8] sm:$0xff]
    %v1748 = vld [vmem:[#allocation8 + $0xb0] sm:$0xff]
    %v1749 = vld [vmem:[#allocation8 + $0xb8] sm:$0xff]
    %v1750 = vld [vmem:[#allocation8 + $0xc0] sm:$0xff]
    %v1751 = vld [vmem:[#allocation8 + $0xc8] sm:$0xff]
    %v1752 = vld [vmem:[#allocation8 + $0xd0] sm:$0xff]
    %v1753 = vld [vmem:[#allocation8 + $0xd8] sm:$0xff]
    %v1754 = vld [vmem:[#allocation8 + $0xe0] sm:$0xff]
    %v1755 = vld [vmem:[#allocation8 + $0xe8] sm:$0xff]
    %v1756 = vld [vmem:[#allocation8 + $0xf0] sm:$0xff]
    %v1757 = vld [vmem:[#allocation8 + $0xf8] sm:$0xff]
    %v1758 = vld [vmem:[#allocation8 + $0x100] sm:$0xff]
    %v1759 = vld [vmem:[#allocation8 + $0x108] sm:$0xff]
    %v1760 = vld [vmem:[#allocation8 + $0x110] sm:$0xff]
    %v1761 = vld [vmem:[#allocation8 + $0x118] sm:$0xff]
    %v1762 = vld [vmem:[#allocation8 + $0x120] sm:$0xff]
    %v1763 = vld [vmem:[#allocation8 + $0x128] sm:$0xff]
    %v1764 = vld [vmem:[#allocation8 + $0x130] sm:$0xff]
    %v1765 = vld [vmem:[#allocation8 + $0x138] sm:$0xff]
    %v1766 = vld [vmem:[#allocation8 + $0x140] sm:$0xff]
    %v1767 = vld [vmem:[#allocation8 + $0x148] sm:$0xff]
    %v1768 = vld [vmem:[#allocation8 + $0x150] sm:$0xff]
    %v1769 = vld [vmem:[#allocation8 + $0x158] sm:$0xff]
    %v1770 = vld [vmem:[#allocation8 + $0x160] sm:$0xff]
    %v1771 = vld [vmem:[#allocation8 + $0x168] sm:$0xff]
    %v1772 = vld [vmem:[#allocation8 + $0x170] sm:$0xff]
    %v1773 = vld [vmem:[#allocation8 + $0x178] sm:$0xff]
    %v1774 = vld [vmem:[#allocation8 + $0x180] sm:$0xff]
    %v1775 = vld [vmem:[#allocation8 + $0x188] sm:$0xff]
    %v1776 = vld [vmem:[#allocation8 + $0x190] sm:$0xff]
    %v1777 = vld [vmem:[#allocation8 + $0x198] sm:$0xff]
    %v1778 = vld [vmem:[#allocation8 + $0x1a0] sm:$0xff]
    %v1779 = vld [vmem:[#allocation8 + $0x1a8] sm:$0xff]
    %v1780 = vld [vmem:[#allocation8 + $0x1b0] sm:$0xff]
    %v1781 = vld [vmem:[#allocation8 + $0x1b8] sm:$0xff]
    %v1782 = vld [vmem:[#allocation8 + $0x1c0] sm:$0xff]
    %v1783 = vld [vmem:[#allocation8 + $0x1c8] sm:$0xff]
    %v1784 = vld [vmem:[#allocation8 + $0x1d0] sm:$0xff]
    %v1785 = vld [vmem:[#allocation8 + $0x1d8] sm:$0xff]
    %v1786 = vld [vmem:[#allocation8 + $0x1e0] sm:$0xff]
    %v1787 = vld [vmem:[#allocation8 + $0x1e8] sm:$0xff]
    %v1788 = vld [vmem:[#allocation8 + $0x1f0] sm:$0xff]
    %v1789 = vld [vmem:[#allocation8 + $0x1f8] sm:$0xff]
    %v1790 = vld [vmem:[%s4] sm:$0x3]
    %v1792 = vperm.slane %v1790, 0
    %v1793 = vperm.slane %v1790, 1
    %v1860 = vunpack.c.l.b16 %v1726
    %v1861 = vunpack.c.h.b16 %v1726
    %v1862 = vunpack.c.l.b16 %v1727
    %v1863 = vunpack.c.h.b16 %v1727
    %v1864 = vunpack.c.l.b16 %v1728
    %v1865 = vunpack.c.h.b16 %v1728
    %v1866 = vunpack.c.l.b16 %v1729
    %v1867 = vunpack.c.h.b16 %v1729
    %v1868 = vunpack.c.l.b16 %v1730
    %v1869 = vunpack.c.h.b16 %v1730
    %v1870 = vunpack.c.l.b16 %v1731
    %v1871 = vunpack.c.h.b16 %v1731
    %v1872 = vunpack.c.l.b16 %v1732
    %v1873 = vunpack.c.h.b16 %v1732
    %v1874 = vunpack.c.l.b16 %v1733
    %v1875 = vunpack.c.h.b16 %v1733
    %v1876 = vunpack.c.l.b16 %v1734
    %v1877 = vunpack.c.h.b16 %v1734
    %v1878 = vunpack.c.l.b16 %v1735
    %v1879 = vunpack.c.h.b16 %v1735
    %v1880 = vunpack.c.l.b16 %v1736
    %v1881 = vunpack.c.h.b16 %v1736
    %v1882 = vunpack.c.l.b16 %v1737
    %v1883 = vunpack.c.h.b16 %v1737
    %v1884 = vunpack.c.l.b16 %v1738
    %v1885 = vunpack.c.h.b16 %v1738
    %v1886 = vunpack.c.l.b16 %v1739
    %v1887 = vunpack.c.h.b16 %v1739
    %v1888 = vunpack.c.l.b16 %v1740
    %v1889 = vunpack.c.h.b16 %v1740
    %v1890 = vunpack.c.l.b16 %v1741
    %v1891 = vunpack.c.h.b16 %v1741
    %v1892 = vunpack.c.l.b16 %v1742
    %v1893 = vunpack.c.h.b16 %v1742
    %v1894 = vunpack.c.l.b16 %v1743
    %v1895 = vunpack.c.h.b16 %v1743
    %v1896 = vunpack.c.l.b16 %v1744
    %v1897 = vunpack.c.h.b16 %v1744
    %v1898 = vunpack.c.l.b16 %v1745
    %v1899 = vunpack.c.h.b16 %v1745
    %v1900 = vunpack.c.l.b16 %v1746
    %v1901 = vunpack.c.h.b16 %v1746
    %v1902 = vunpack.c.l.b16 %v1747
    %v1903 = vunpack.c.h.b16 %v1747
    %v1904 = vunpack.c.l.b16 %v1748
    %v1905 = vunpack.c.h.b16 %v1748
    %v1906 = vunpack.c.l.b16 %v1749
    %v1907 = vunpack.c.h.b16 %v1749
    %v1908 = vunpack.c.l.b16 %v1750
    %v1909 = vunpack.c.h.b16 %v1750
    %v1910 = vunpack.c.l.b16 %v1751
    %v1911 = vunpack.c.h.b16 %v1751
    %v1912 = vunpack.c.l.b16 %v1752
    %v1913 = vunpack.c.h.b16 %v1752
    %v1914 = vunpack.c.l.b16 %v1753
    %v1915 = vunpack.c.h.b16 %v1753
    %v1916 = vunpack.c.l.b16 %v1754
    %v1917 = vunpack.c.h.b16 %v1754
    %v1918 = vunpack.c.l.b16 %v1755
    %v1919 = vunpack.c.h.b16 %v1755
    %v1920 = vunpack.c.l.b16 %v1756
    %v1921 = vunpack.c.h.b16 %v1756
    %v1922 = vunpack.c.l.b16 %v1757
    %v1923 = vunpack.c.h.b16 %v1757
    %v1924 = vunpack.c.l.b16 %v1758
    %v1925 = vunpack.c.h.b16 %v1758
    %v1926 = vunpack.c.l.b16 %v1759
    %v1927 = vunpack.c.h.b16 %v1759
    %v1928 = vunpack.c.l.b16 %v1760
    %v1929 = vunpack.c.h.b16 %v1760
    %v1930 = vunpack.c.l.b16 %v1761
    %v1931 = vunpack.c.h.b16 %v1761
    %v1932 = vunpack.c.l.b16 %v1762
    %v1933 = vunpack.c.h.b16 %v1762
    %v1934 = vunpack.c.l.b16 %v1763
    %v1935 = vunpack.c.h.b16 %v1763
    %v1936 = vunpack.c.l.b16 %v1764
    %v1937 = vunpack.c.h.b16 %v1764
    %v1938 = vunpack.c.l.b16 %v1765
    %v1939 = vunpack.c.h.b16 %v1765
    %v1940 = vunpack.c.l.b16 %v1766
    %v1941 = vunpack.c.h.b16 %v1766
    %v1942 = vunpack.c.l.b16 %v1767
    %v1943 = vunpack.c.h.b16 %v1767
    %v1944 = vunpack.c.l.b16 %v1768
    %v1945 = vunpack.c.h.b16 %v1768
    %v1946 = vunpack.c.l.b16 %v1769
    %v1947 = vunpack.c.h.b16 %v1769
    %v1948 = vunpack.c.l.b16 %v1770
    %v1949 = vunpack.c.h.b16 %v1770
    %v1950 = vunpack.c.l.b16 %v1771
    %v1951 = vunpack.c.h.b16 %v1771
    %v1952 = vunpack.c.l.b16 %v1772
    %v1953 = vunpack.c.h.b16 %v1772
    %v1954 = vunpack.c.l.b16 %v1773
    %v1955 = vunpack.c.h.b16 %v1773
    %v1956 = vunpack.c.l.b16 %v1774
    %v1957 = vunpack.c.h.b16 %v1774
    %v1958 = vunpack.c.l.b16 %v1775
    %v1959 = vunpack.c.h.b16 %v1775
    %v1960 = vunpack.c.l.b16 %v1776
    %v1961 = vunpack.c.h.b16 %v1776
    %v1962 = vunpack.c.l.b16 %v1777
    %v1963 = vunpack.c.h.b16 %v1777
    %v1964 = vunpack.c.l.b16 %v1778
    %v1965 = vunpack.c.h.b16 %v1778
    %v1966 = vunpack.c.l.b16 %v1779
    %v1967 = vunpack.c.h.b16 %v1779
    %v1968 = vunpack.c.l.b16 %v1780
    %v1969 = vunpack.c.h.b16 %v1780
    %v1970 = vunpack.c.l.b16 %v1781
    %v1971 = vunpack.c.h.b16 %v1781
    %v1972 = vunpack.c.l.b16 %v1782
    %v1973 = vunpack.c.h.b16 %v1782
    %v1974 = vunpack.c.l.b16 %v1783
    %v1975 = vunpack.c.h.b16 %v1783
    %v1976 = vunpack.c.l.b16 %v1784
    %v1977 = vunpack.c.h.b16 %v1784
    %v1978 = vunpack.c.l.b16 %v1785
    %v1979 = vunpack.c.h.b16 %v1785
    %v1980 = vunpack.c.l.b16 %v1786
    %v1981 = vunpack.c.h.b16 %v1786
    %v1982 = vunpack.c.l.b16 %v1787
    %v1983 = vunpack.c.h.b16 %v1787
    %v1984 = vunpack.c.l.b16 %v1788
    %v1985 = vunpack.c.h.b16 %v1788
    %v1986 = vunpack.c.l.b16 %v1789
    %v1987 = vunpack.c.h.b16 %v1789
    %v1988 = vpack.c.b16 %v1862, %v1860
    %v1989 = vpack.c.b16 %v1863, %v1861
    %v1990 = vpack.c.b16 %v1866, %v1864
    %v1991 = vpack.c.b16 %v1867, %v1865
    %v1992 = vpack.c.b16 %v1870, %v1868
    %v1993 = vpack.c.b16 %v1871, %v1869
    %v1994 = vpack.c.b16 %v1874, %v1872
    %v1995 = vpack.c.b16 %v1875, %v1873
    %v1996 = vpack.c.b16 %v1878, %v1876
    %v1997 = vpack.c.b16 %v1879, %v1877
    %v1998 = vpack.c.b16 %v1882, %v1880
    %v1999 = vpack.c.b16 %v1883, %v1881
    %v2000 = vpack.c.b16 %v1886, %v1884
    %v2001 = vpack.c.b16 %v1887, %v1885
    %v2002 = vpack.c.b16 %v1890, %v1888
    %v2003 = vpack.c.b16 %v1891, %v1889
    %v2004 = vpack.c.b16 %v1894, %v1892
    %v2005 = vpack.c.b16 %v1895, %v1893
    %v2006 = vpack.c.b16 %v1898, %v1896
    %v2007 = vpack.c.b16 %v1899, %v1897
    %v2008 = vpack.c.b16 %v1902, %v1900
    %v2009 = vpack.c.b16 %v1903, %v1901
    %v2010 = vpack.c.b16 %v1906, %v1904
    %v2011 = vpack.c.b16 %v1907, %v1905
    %v2012 = vpack.c.b16 %v1910, %v1908
    %v2013 = vpack.c.b16 %v1911, %v1909
    %v2014 = vpack.c.b16 %v1914, %v1912
    %v2015 = vpack.c.b16 %v1915, %v1913
    %v2016 = vpack.c.b16 %v1918, %v1916
    %v2017 = vpack.c.b16 %v1919, %v1917
    %v2018 = vpack.c.b16 %v1922, %v1920
    %v2019 = vpack.c.b16 %v1923, %v1921
    %v2020 = vpack.c.b16 %v1926, %v1924
    %v2021 = vpack.c.b16 %v1927, %v1925
    %v2022 = vpack.c.b16 %v1930, %v1928
    %v2023 = vpack.c.b16 %v1931, %v1929
    %v2024 = vpack.c.b16 %v1934, %v1932
    %v2025 = vpack.c.b16 %v1935, %v1933
    %v2026 = vpack.c.b16 %v1938, %v1936
    %v2027 = vpack.c.b16 %v1939, %v1937
    %v2028 = vpack.c.b16 %v1942, %v1940
    %v2029 = vpack.c.b16 %v1943, %v1941
    %v2030 = vpack.c.b16 %v1946, %v1944
    %v2031 = vpack.c.b16 %v1947, %v1945
    %v2032 = vpack.c.b16 %v1950, %v1948
    %v2033 = vpack.c.b16 %v1951, %v1949
    %v2034 = vpack.c.b16 %v1954, %v1952
    %v2035 = vpack.c.b16 %v1955, %v1953
    %v2036 = vpack.c.b16 %v1958, %v1956
    %v2037 = vpack.c.b16 %v1959, %v1957
    %v2038 = vpack.c.b16 %v1962, %v1960
    %v2039 = vpack.c.b16 %v1963, %v1961
    %v2040 = vpack.c.b16 %v1966, %v1964
    %v2041 = vpack.c.b16 %v1967, %v1965
    %v2042 = vpack.c.b16 %v1970, %v1968
    %v2043 = vpack.c.b16 %v1971, %v1969
    %v2044 = vpack.c.b16 %v1974, %v1972
    %v2045 = vpack.c.b16 %v1975, %v1973
    %v2046 = vpack.c.b16 %v1978, %v1976
    %v2047 = vpack.c.b16 %v1979, %v1977
    %v2048 = vpack.c.b16 %v1982, %v1980
    %v2049 = vpack.c.b16 %v1983, %v1981
    %v2050 = vpack.c.b16 %v1986, %v1984
    %v2051 = vpack.c.b16 %v1987, %v1985
    %2116 = vmatpush.bf16.msra.mxu0 %v2002
    %2117 = vmatpush.bf16.msra.mxu0 %v2000
    %2118 = vmatpush.bf16.msra.mxu0 %v1998
    %2119 = vmatpush.bf16.msra.mxu0 %v1996
    %2120 = vmatpush.bf16.msra.mxu0 %v1994
    %2121 = vmatpush.bf16.msra.mxu0 %v1992
    %2122 = vmatpush.bf16.msra.mxu0 %v1990
    %2123 = vmatpush.bf16.msra.mxu0 %v1988
    %2124 = vmatmul.bf16.gmra.mxu0 %v1722
    %v2125 = vpop.f32.mrf.mxu0
    %v2126 = vadd.f32 %v1792, %v2125
    %v2127 = vpop.f32.mrf.mxu0
    %v2128 = vadd.f32 %v1792, %v2127
    %2129 = vdwg.mxu0
    %2130 = vmatpush.bf16.msra.mxu0 %v2018
    %2131 = vmatpush.bf16.msra.mxu0 %v2016
    %2132 = vmatpush.bf16.msra.mxu0 %v2014
    %2133 = vmatpush.bf16.msra.mxu0 %v2012
    %2134 = vmatpush.bf16.msra.mxu0 %v2010
    %2135 = vmatpush.bf16.msra.mxu0 %v2008
    %2136 = vmatpush.bf16.msra.mxu0 %v2006
    %2137 = vmatpush.bf16.msra.mxu0 %v2004
    %2138 = vmatmul.bf16.gmra.mxu0 %v1723
    %v2139 = vpop.f32.mrf.mxu0
    %v2140 = vadd.f32 %v2126, %v2139
    %v2141 = vpop.f32.mrf.mxu0
    %v2142 = vadd.f32 %v2128, %v2141
    %2143 = vdwg.mxu0
    %2144 = vmatpush.bf16.msra.mxu0 %v2034
    %2145 = vmatpush.bf16.msra.mxu0 %v2032
    %2146 = vmatpush.bf16.msra.mxu0 %v2030
    %2147 = vmatpush.bf16.msra.mxu0 %v2028
    %2148 = vmatpush.bf16.msra.mxu0 %v2026
    %2149 = vmatpush.bf16.msra.mxu0 %v2024
    %2150 = vmatpush.bf16.msra.mxu0 %v2022
    %2151 = vmatpush.bf16.msra.mxu0 %v2020
    %2152 = vmatmul.bf16.gmra.mxu0 %v1724
    %v2153 = vpop.f32.mrf.mxu0
    %v2154 = vadd.f32 %v2140, %v2153
    %v2155 = vpop.f32.mrf.mxu0
    %v2156 = vadd.f32 %v2142, %v2155
    %2157 = vdwg.mxu0
    %2158 = vmatpush.bf16.msra.mxu0 %v2050
    %2159 = vmatpush.bf16.msra.mxu0 %v2048
    %2160 = vmatpush.bf16.msra.mxu0 %v2046
    %2161 = vmatpush.bf16.msra.mxu0 %v2044
    %2162 = vmatpush.bf16.msra.mxu0 %v2042
    %2163 = vmatpush.bf16.msra.mxu0 %v2040
    %2164 = vmatpush.bf16.msra.mxu0 %v2038
    %2165 = vmatpush.bf16.msra.mxu0 %v2036
    %2166 = vmatmul.bf16.gmra.mxu0 %v1725
    %v2167 = vpop.f32.mrf.mxu0
    %v2168 = vadd.f32 %v2154, %v2167
    %v2169 = vpop.f32.mrf.mxu0
    %v2170 = vadd.f32 %v2156, %v2169
    %2171 = vdwg.mxu0
    %2172 = vmatpush.bf16.msra.mxu0 %v2003
    %2173 = vmatpush.bf16.msra.mxu0 %v2001
    %2174 = vmatpush.bf16.msra.mxu0 %v1999
    %2175 = vmatpush.bf16.msra.mxu0 %v1997
    %2176 = vmatpush.bf16.msra.mxu0 %v1995
    %2177 = vmatpush.bf16.msra.mxu0 %v1993
    %2178 = vmatpush.bf16.msra.mxu0 %v1991
    %2179 = vmatpush.bf16.msra.mxu0 %v1989
    %2180 = vmatmul.bf16.gmra.mxu0 %v1722
    %v2181 = vpop.f32.mrf.mxu0
    %v2182 = vadd.f32 %v1793, %v2181
    %v2183 = vpop.f32.mrf.mxu0
    %v2184 = vadd.f32 %v1793, %v2183
    %2185 = vdwg.mxu0
    %2186 = vmatpush.bf16.msra.mxu0 %v2019
    %2187 = vmatpush.bf16.msra.mxu0 %v2017
    %2188 = vmatpush.bf16.msra.mxu0 %v2015
    %2189 = vmatpush.bf16.msra.mxu0 %v2013
    %2190 = vmatpush.bf16.msra.mxu0 %v2011
    %2191 = vmatpush.bf16.msra.mxu0 %v2009
    %2192 = vmatpush.bf16.msra.mxu0 %v2007
    %2193 = vmatpush.bf16.msra.mxu0 %v2005
    %2194 = vmatmul.bf16.gmra.mxu0 %v1723
    %v2195 = vpop.f32.mrf.mxu0
    %v2196 = vadd.f32 %v2182, %v2195
    %v2197 = vpop.f32.mrf.mxu0
    %v2198 = vadd.f32 %v2184, %v2197
    %2199 = vdwg.mxu0
    %2200 = vmatpush.bf16.msra.mxu0 %v2035
    %2201 = vmatpush.bf16.msra.mxu0 %v2033
    %2202 = vmatpush.bf16.msra.mxu0 %v2031
    %2203 = vmatpush.bf16.msra.mxu0 %v2029
    %2204 = vmatpush.bf16.msra.mxu0 %v2027
    %2205 = vmatpush.bf16.msra.mxu0 %v2025
    %2206 = vmatpush.bf16.msra.mxu0 %v2023
    %2207 = vmatpush.bf16.msra.mxu0 %v2021
    %2208 = vmatmul.bf16.gmra.mxu0 %v1724
    %v2209 = vpop.f32.mrf.mxu0
    %v2210 = vadd.f32 %v2196, %v2209
    %v2211 = vpop.f32.mrf.mxu0
    %v2212 = vadd.f32 %v2198, %v2211
    %2213 = vdwg.mxu0
    %2214 = vmatpush.bf16.msra.mxu0 %v2051
    %2215 = vmatpush.bf16.msra.mxu0 %v2049
    %2216 = vmatpush.bf16.msra.mxu0 %v2047
    %2217 = vmatpush.bf16.msra.mxu0 %v2045
    %2218 = vmatpush.bf16.msra.mxu0 %v2043
    %2219 = vmatpush.bf16.msra.mxu0 %v2041
    %2220 = vmatpush.bf16.msra.mxu0 %v2039
    %2221 = vmatpush.bf16.msra.mxu0 %v2037
    %2222 = vmatmul.bf16.gmra.mxu0 %v1725
    %v2223 = vpop.f32.mrf.mxu0
    %v2224 = vadd.f32 %v2210, %v2223
    %v2225 = vpop.f32.mrf.mxu0
    %v2226 = vadd.f32 %v2212, %v2225
    %2227 = vdwg.mxu0
    %v2228 = vmax.f32 %v2168, 0.0
    %v2229 = vmax.f32 %v2224, 0.0
    %v2230 = vmax.f32 %v2170, 0.0
    %v2231 = vmax.f32 %v2226, 0.0
    %v2232 = vpack.c.bf16 %v2230, %v2228
    %v2233 = vpack.c.bf16 %v2231, %v2229
    %v2234 = vld [vmem:[#allocation10] sm:$0xf]
    %v2235 = vld [vmem:[#allocation10 + $0x4] sm:$0xf]
    %v2236 = vld [vmem:[#allocation10 + $0x8] sm:$0xf]
    %v2237 = vld [vmem:[#allocation10 + $0xc] sm:$0xf]
    %v2238 = vld [vmem:[#allocation10 + $0x10] sm:$0xf]
    %v2239 = vld [vmem:[#allocation10 + $0x14] sm:$0xf]
    %v2240 = vld [vmem:[#allocation10 + $0x18] sm:$0xf]
    %v2241 = vld [vmem:[#allocation10 + $0x1c] sm:$0xf]
    %v2242 = vld [vmem:[#allocation10 + $0x20] sm:$0xf]
    %v2243 = vld [vmem:[#allocation10 + $0x24] sm:$0xf]
    %v2244 = vld [vmem:[#allocation10 + $0x28] sm:$0xf]
    %v2245 = vld [vmem:[#allocation10 + $0x2c] sm:$0xf]
    %v2246 = vld [vmem:[#allocation10 + $0x30] sm:$0xf]
    %v2247 = vld [vmem:[#allocation10 + $0x34] sm:$0xf]
    %v2248 = vld [vmem:[#allocation10 + $0x38] sm:$0xf]
    %v2249 = vld [vmem:[#allocation10 + $0x3c] sm:$0xf]
    %v2250 = vld [vmem:[#allocation10 + $0x40] sm:$0xf]
    %v2251 = vld [vmem:[#allocation10 + $0x44] sm:$0xf]
    %v2252 = vld [vmem:[#allocation10 + $0x48] sm:$0xf]
    %v2253 = vld [vmem:[#allocation10 + $0x4c] sm:$0xf]
    %v2254 = vld [vmem:[#allocation10 + $0x50] sm:$0xf]
    %v2255 = vld [vmem:[#allocation10 + $0x54] sm:$0xf]
    %v2256 = vld [vmem:[#allocation10 + $0x58] sm:$0xf]
    %v2257 = vld [vmem:[#allocation10 + $0x5c] sm:$0xf]
    %v2258 = vld [vmem:[#allocation10 + $0x60] sm:$0xf]
    %v2259 = vld [vmem:[#allocation10 + $0x64] sm:$0xf]
    %v2260 = vld [vmem:[#allocation10 + $0x68] sm:$0xf]
    %v2261 = vld [vmem:[#allocation10 + $0x6c] sm:$0xf]
    %v2262 = vld [vmem:[#allocation10 + $0x70] sm:$0xf]
    %v2263 = vld [vmem:[#allocation10 + $0x74] sm:$0xf]
    %v2264 = vld [vmem:[#allocation10 + $0x78] sm:$0xf]
    %v2265 = vld [vmem:[#allocation10 + $0x7c] sm:$0xf]
    %v2266 = vld [vmem:[%s6] sm:$0x1]
    %v2268 = vperm.slane %v2266, 0
    %v2302 = vunpack.c.l.b16 %v2234
    %v2303 = vunpack.c.l.b16 %v2235
    %v2304 = vunpack.c.l.b16 %v2236
    %v2305 = vunpack.c.l.b16 %v2237
    %v2306 = vunpack.c.l.b16 %v2238
    %v2307 = vunpack.c.l.b16 %v2239
    %v2308 = vunpack.c.l.b16 %v2240
    %v2309 = vunpack.c.l.b16 %v2241
    %v2310 = vunpack.c.l.b16 %v2242
    %v2311 = vunpack.c.l.b16 %v2243
    %v2312 = vunpack.c.l.b16 %v2244
    %v2313 = vunpack.c.l.b16 %v2245
    %v2314 = vunpack.c.l.b16 %v2246
    %v2315 = vunpack.c.l.b16 %v2247
    %v2316 = vunpack.c.l.b16 %v2248
    %v2317 = vunpack.c.l.b16 %v2249
    %v2318 = vunpack.c.l.b16 %v2250
    %v2319 = vunpack.c.l.b16 %v2251
    %v2320 = vunpack.c.l.b16 %v2252
    %v2321 = vunpack.c.l.b16 %v2253
    %v2322 = vunpack.c.l.b16 %v2254
    %v2323 = vunpack.c.l.b16 %v2255
    %v2324 = vunpack.c.l.b16 %v2256
    %v2325 = vunpack.c.l.b16 %v2257
    %v2326 = vunpack.c.l.b16 %v2258
    %v2327 = vunpack.c.l.b16 %v2259
    %v2328 = vunpack.c.l.b16 %v2260
    %v2329 = vunpack.c.l.b16 %v2261
    %v2330 = vunpack.c.l.b16 %v2262
    %v2331 = vunpack.c.l.b16 %v2263
    %v2332 = vunpack.c.l.b16 %v2264
    %v2333 = vunpack.c.l.b16 %v2265
    %v2334 = vpack.c.b16 %v2303, %v2302
    %v2335 = vpack.c.b16 %v2305, %v2304
    %v2336 = vpack.c.b16 %v2307, %v2306
    %v2337 = vpack.c.b16 %v2309, %v2308
    %v2338 = vpack.c.b16 %v2311, %v2310
    %v2339 = vpack.c.b16 %v2313, %v2312
    %v2340 = vpack.c.b16 %v2315, %v2314
    %v2341 = vpack.c.b16 %v2317, %v2316
    %v2342 = vpack.c.b16 %v2319, %v2318
    %v2343 = vpack.c.b16 %v2321, %v2320
    %v2344 = vpack.c.b16 %v2323, %v2322
    %v2345 = vpack.c.b16 %v2325, %v2324
    %v2346 = vpack.c.b16 %v2327, %v2326
    %v2347 = vpack.c.b16 %v2329, %v2328
    %v2348 = vpack.c.b16 %v2331, %v2330
    %v2349 = vpack.c.b16 %v2333, %v2332
    %2366 = vmatpush.bf16.msra.mxu0 %v2341
    %2367 = vmatpush.bf16.msra.mxu0 %v2340
    %2368 = vmatpush.bf16.msra.mxu0 %v2339
    %2369 = vmatpush.bf16.msra.mxu0 %v2338
    %2370 = vmatpush.bf16.msra.mxu0 %v2337
    %2371 = vmatpush.bf16.msra.mxu0 %v2336
    %2372 = vmatpush.bf16.msra.mxu0 %v2335
    %2373 = vmatpush.bf16.msra.mxu0 %v2334
    %2374 = vmatmul.bf16.gmra.mxu0 %v2232
    %v2375 = vpop.f32.mrf.mxu0
    %v2376 = vadd.f32 %v2268, %v2375
    %v2377 = vpop.f32.mrf.mxu0
    %v2378 = vadd.f32 %v2268, %v2377
    %2379 = vdwg.mxu0
    %2380 = vmatpush.bf16.msra.mxu0 %v2349
    %2381 = vmatpush.bf16.msra.mxu0 %v2348
    %2382 = vmatpush.bf16.msra.mxu0 %v2347
    %2383 = vmatpush.bf16.msra.mxu0 %v2346
    %2384 = vmatpush.bf16.msra.mxu0 %v2345
    %2385 = vmatpush.bf16.msra.mxu0 %v2344
    %2386 = vmatpush.bf16.msra.mxu0 %v2343
    %2387 = vmatpush.bf16.msra.mxu0 %v2342
    %2388 = vmatmul.bf16.gmra.mxu0 %v2233
    %v2389 = vpop.f32.mrf.mxu0
    %v2390 = vadd.f32 %v2376, %v2389
    %v2391 = vpop.f32.mrf.mxu0
    %v2392 = vadd.f32 %v2378, %v2391
    %2393 = vdwg.mxu0
    %v2394 = vmax.f32 %v2390, 0.0
    %v2395 = vmax.f32 %v2392, 0.0
    %v2396 = vld [vmem:[%s7] sm:$0x1]
    %v2398 = vperm.slane %v2396, 0
    %v2400 = vmul.f32 %v2394, %v2398
    %v2401 = vmul.f32 %v2395, %v2398
    %2402 = vadd.xlane.f32.xlu0 %v2400
    %v2403 = vpop.xlane.xlu0 %2402
    %2404 = vadd.xlane.f32.xlu0 %v2401
    %v2405 = vpop.xlane.xlu0 %2404
    %v2406 = vld [vmem:[#allocation2] sm:$0x1]
    %v2408 = vperm.slane %v2406, 0
    %v2410 = vadd.f32 %v2403, %v2408
    %v2411 = vadd.f32 %v2405, %v2408
    %v2412 = vxor.u32 %v2410, 2147483648
    %v2413 = vxor.u32 %v2411, 2147483648
    %v2414 = vmul.f32 %v2412, 1.442695
    %v2415 = vpow.pop %v2414
    %v2416 = vmul.f32 %v2413, 1.442695
    %v2417 = vpow.pop %v2416
    %v2418 = vadd.f32 %v2415, 1.0
    %v2419 = vadd.f32 %v2417, 1.0
    %v2420 = vrcp.pop %v2418
    %v2421 = vmul.f32 %v2418, %v2420
    %v2422 = vsub.f32 1.0, %v2421
    %v2423 = vmul.f32 %v2420, %v2422
    %v2424 = vadd.f32 %v2420, %v2423
    %vm2425 = vweird.f32 %v2418
    %vm2426 = vweird.f32 %v2420
    %vm2427 = vmor %vm2425, %vm2426
    %v2428 = vsel %vm2427, %v2420, %v2424
    %v2429 = vand.u32 2147483647, %v2418
    %vm2430 = vcmp.eq.f32.partialorder %v2429, 8.507059e+37
    %v2431 = vand.u32 %v2418, 2147483648
    %v2432 = vor.u32 1.1754944e-38, %v2431
    %v2433 = vsel %vm2430, %v2432, %v2428
    %v2434 = vmul.f32 1.0, %v2433
    %v2435 = vrcp.pop %v2419
    %v2436 = vmul.f32 %v2419, %v2435
    %v2437 = vsub.f32 1.0, %v2436
    %v2438 = vmul.f32 %v2435, %v2437
    %v2439 = vadd.f32 %v2435, %v2438
    %vm2440 = vweird.f32 %v2419
    %vm2441 = vweird.f32 %v2435
    %vm2442 = vmor %vm2440, %vm2441
    %v2443 = vsel %vm2442, %v2435, %v2439
    %v2444 = vand.u32 2147483647, %v2419
    %vm2445 = vcmp.eq.f32.partialorder %v2444, 8.507059e+37
    %v2446 = vand.u32 %v2419, 2147483648
    %v2447 = vor.u32 1.1754944e-38, %v2446
    %v2448 = vsel %vm2445, %v2447, %v2443
    %v2449 = vmul.f32 1.0, %v2448
    %vm2450 = vcmask 7168
    %2451 = vst.msk [vmem:[%s9] sm:$0xff] %vm2450, %v2434
    %2452 = vst.msk [vmem:[%s9 + $0x8] sm:$0xff] %vm2450, %v2449
    // Predicated region
    $region58: #{tpu_custom_call.1} parent=1 // pred_check
      _
    $region59: #{tpu_custom_call.1} parent=1 // pred_check_branch
      %2454 = sbr.rel (0) target = $region61
    $region60: #{tpu_custom_call.1} parent=1 // pred_region
      _
    $region61: #{tpu_custom_call.1} parent=1 // pred_fallthru
      _
    // Predicated region
    $region62: #{tpu_custom_call.1} parent=1 // pred_check
      _
    $region63: #{tpu_custom_call.1} parent=1 // pred_check_branch
      %2456 = sbr.rel (0) target = $region65
    $region64: #{tpu_custom_call.1} parent=1 // pred_region
      _
    $region65: #{tpu_custom_call.1} parent=1 // pred_fallthru
      _
    %2457 = vsyncpa [#allocation4], 1
    %2458 = vsyncpa [#allocation6], 1
    %2459 = vsyncpa [#allocation9], 1

</llo_original>
